<compile_context>
chip_gen: v7x
topology: tpu7x:2x2x1
jax: 0.10.0
libtpu: 0.0.40
codegen_flags: <defaults>
</compile_context>

<pallas_src>
import functools

import jax
import jax.numpy as jnp
from jax import lax
from jax.experimental import pallas as pl
from jax.experimental.pallas import tpu as pltpu


def _round_up(x, m):
    return (x + m - 1) // m * m


# ----------------------- fused seg-net + Dice/CE statistics kernel -----------------------

def fused_seg_loss_kernel(x_ref, lab_ref, w1_ref, b1_ref, w2_ref, b2_ref,
                          pred_ref, ce_ref, inter_ref, psum_ref, tsum_ref,
                          *, W):
    # x_ref:    (Cin, Np) f32   zero-padded image, flattened (H+2)*(W+2), lane-padded to Np
    # lab_ref:  (1, Np)  int32  labels in the same layout, -1 marks pad / invalid pixels
    # w1_ref:   (9, HID, Cin) bf16   b1_ref: (HID, 1) f32
    # w2_ref:   (K, HID)      bf16   b2_ref: (K, 1)  f32
    # pred_ref: (K, Np) f32 logits (channel-major, pixels on lanes)
    # ce_ref:   (1, 1)  per-image CE sum; inter/psum/tsum: (K, 1) per-image Dice partials
    Np = x_ref.shape[-1]
    HID = b1_ref.shape[0]
    K = w2_ref.shape[0]
    Wp = W + 2

    x = x_ref[...]                                   # (Cin, Np) f32

    # --- 3x3 conv as 9 shifted matmuls; taps formed in VMEM (no im2col in HBM) ---
    acc = jnp.zeros((HID, Np), jnp.float32)
    for ky in range(3):
        for kx in range(3):
            d = (ky - 1) * Wp + (kx - 1)             # flat tap offset in padded image
            tap = x if d == 0 else pltpu.roll(x, shift=(-d) % Np, axis=1)
            acc = acc + jnp.dot(w1_ref[ky * 3 + kx],          # (HID, Cin) bf16
                                tap.astype(jnp.bfloat16),     # (Cin, Np)  bf16
                                preferred_element_type=jnp.float32)
    h = jnp.maximum(acc + b1_ref[...], 0.0)                   # (HID, Np)
    logits = jnp.dot(w2_ref[...], h.astype(jnp.bfloat16),
                     preferred_element_type=jnp.float32) + b2_ref[...]   # (K, Np)
    pred_ref[...] = logits

    # --- fused Dice + CE statistics, lane-dense (pixels on lanes, K on sublanes) ---
    lab = lab_ref[...]                                # (1, Np) int32, -1 = invalid
    valid = (lab >= 0).astype(jnp.float32)            # (1, Np)
    kk = lax.broadcasted_iota(jnp.int32, (K, Np), 0)  # class index on sublanes
    t = (lab == kk).astype(jnp.float32)               # (K, Np) one-hot; 0 at invalid

    m = jnp.max(logits, axis=0, keepdims=True)        # (1, Np)  reduce over K rows
    z = logits - m
    e = jnp.exp(z)
    s = jnp.sum(e, axis=0, keepdims=True)             # (1, Np)
    logp = z - jnp.log(s)                             # exact log-softmax for CE
    p = e * pl.reciprocal(s, approx=True)             # EUP; only Dice sees the approx

    ce_rows = jnp.sum(-t * logp, axis=1, keepdims=True)        # (K, 1)
    ce_ref[...] = jnp.sum(ce_rows, axis=0, keepdims=True)      # (1, 1)
    inter_ref[...] = jnp.sum(p * t, axis=1, keepdims=True)     # (K, 1)
    psum_ref[...] = jnp.sum(p * valid, axis=1, keepdims=True)  # (K, 1) valid pixels only
    tsum_ref[...] = jnp.sum(t, axis=1, keepdims=True)          # (K, 1)


def run_fused(xflat, labflat, w1, b1, w2, b2, *, W):
    B, Cin, Np = xflat.shape
    K, HID = w2.shape
    kern = functools.partial(fused_seg_loss_kernel, W=W)
    out_shapes = (
        jax.ShapeDtypeStruct((B, K, Np), jnp.float32),   # logits (flat-padded layout)
        jax.ShapeDtypeStruct((B, 1, 1), jnp.float32),    # per-image CE sum
        jax.ShapeDtypeStruct((B, K, 1), jnp.float32),    # per-image Dice intersection
        jax.ShapeDtypeStruct((B, K, 1), jnp.float32),    # per-image sum of probs
        jax.ShapeDtypeStruct((B, K, 1), jnp.float32),    # per-image sum of targets
    )
    return pl.pallas_call(
        kern,
        out_shape=out_shapes,
        grid=(B,),
        in_specs=[
            pl.BlockSpec((None, Cin, Np), lambda b: (b, 0, 0)),
            pl.BlockSpec((None, 1, Np), lambda b: (b, 0, 0)),
            pl.BlockSpec((9, HID, Cin), lambda b: (0, 0, 0)),
            pl.BlockSpec((HID, 1), lambda b: (0, 0)),
            pl.BlockSpec((K, HID), lambda b: (0, 0)),
            pl.BlockSpec((K, 1), lambda b: (0, 0)),
        ],
        out_specs=[
            pl.BlockSpec((None, K, Np), lambda b: (b, 0, 0)),
            pl.BlockSpec((None, 1, 1), lambda b: (b, 0, 0)),
            pl.BlockSpec((None, K, 1), lambda b: (b, 0, 0)),
            pl.BlockSpec((None, K, 1), lambda b: (b, 0, 0)),
            pl.BlockSpec((None, K, 1), lambda b: (b, 0, 0)),
        ],
        compiler_params=pltpu.CompilerParams(
            dimension_semantics=("parallel",)),   # per-image partial stats => no reduction axis
    )(xflat, labflat, w1, b1, w2, b2)


# ----------------------------- params & wrapper -----------------------------

def init_params(cin, hid, k):
    """Deterministic synthetic parameters (no checkpoint load). Weights in bf16 for the MXU."""
    key = jax.random.PRNGKey(42)
    k1, k2 = jax.random.split(key)
    w1 = (jax.random.normal(k1, (9, hid, cin), jnp.float32)
          * (1.0 / jnp.sqrt(cin * 9.0))).astype(jnp.bfloat16)   # tap-major conv3x3 weight
    b1 = jnp.zeros((hid, 1), jnp.float32)
    w2 = (jax.random.normal(k2, (k, hid), jnp.float32)
          * (1.0 / jnp.sqrt(float(hid)))).astype(jnp.bfloat16)  # 1x1 conv weight
    b2 = jnp.zeros((k, 1), jnp.float32)
    return w1, b1, w2, b2


@functools.partial(jax.jit, static_argnames=("num_classes",))
def network_wrapper_forward(x, mask, w1, b1, w2, b2, *, num_classes):
    """Equivalent of NetworkWrapper.forward(batch) with batch={'input': x, 'mask': mask}.

    Returns (pred, loss, scalar_stats, image_stats).  pred is NCHW [B, K, H, W]."""
    B, Cin, H, W = x.shape
    K = num_classes
    Ppad = (H + 2) * (W + 2)
    Np = _round_up(Ppad, 128)

    # Stage activation once: spatial zero pad (conv 'same'), flatten, lane-pad to 128-mult.
    # TODO(synk): for a best-case pipeline the activation would already live in HBM in this
    # (optionally bf16) layout, removing this staging pass entirely.
    xp = jnp.pad(x, ((0, 0), (0, 0), (1, 1), (1, 1)))
    xflat = xp.reshape(B, Cin, Ppad)
    if Np != Ppad:
        xflat = jnp.pad(xflat, ((0, 0), (0, 0), (0, Np - Ppad)))

    # Labels in the same flat layout; -1 marks padded/invalid positions (no one-hot in HBM).
    labp = jnp.pad(mask.astype(jnp.int32), ((0, 0), (1, 1), (1, 1)), constant_values=-1)
    labflat = labp.reshape(B, 1, Ppad)
    if Np != Ppad:
        labflat = jnp.pad(labflat, ((0, 0), (0, 0), (0, Np - Ppad)), constant_values=-1)

    pred_flat, ce, inter, psum, tsum = run_fused(xflat, labflat, w1, b1, w2, b2, W=W)

    # Un-pad pred back to NCHW [B, K, H, W] (channel-major already -> no transpose pass).
    pred = pred_flat[:, :, :Ppad].reshape(B, K, H + 2, W + 2)[:, :, 1:H + 1, 1:W + 1]

    # Finalize Dice_CE from the per-image partial statistics (tiny scalar math).
    n_pix = B * H * W
    eps = 1e-5
    ce_loss = jnp.sum(ce) / n_pix
    inter_c = jnp.sum(inter, axis=0)[:, 0]
    psum_c = jnp.sum(psum, axis=0)[:, 0]
    tsum_c = jnp.sum(tsum, axis=0)[:, 0]
    dice_per_class = 1.0 - (2.0 * inter_c + eps) / (psum_c + tsum_c + eps)
    dice_loss = jnp.mean(dice_per_class)
    loss = ce_loss + dice_loss

    scalar_stats = {"loss": loss}
    image_stats = {}
    # TODO(synk): `del batch['input']; gc.collect()` is host-side memory management with no kernel equivalent.
    return pred, loss, scalar_stats, image_stats


if __name__ == "__main__":
    # Small deterministic example consistent with NCHW segmentation input.
    B, Cin, H, W = 2, 4, 16, 16
    HID, K = 32, 4

    key = jax.random.PRNGKey(0)
    kx, km = jax.random.split(key)
    x = jax.random.normal(kx, (B, Cin, H, W), jnp.float32)
    mask = jax.random.randint(km, (B, H, W), 0, K, jnp.int32)

    w1, b1, w2, b2 = init_params(Cin, HID, K)

    pred, loss, scalar_stats, image_stats = network_wrapper_forward(
        x, mask, w1, b1, w2, b2, num_classes=K)
    jax.block_until_ready((pred, loss))

    assert pred.shape == (B, K, H, W)
    assert loss.shape == ()
    assert jnp.isfinite(loss)
    print("KERNEL_OK")
</pallas_src>

<mosaic_0001>
module attributes {stable_mosaic.version = 11 : i64} {
  func.func @fused_seg_loss_kernel(%arg0: i32, %arg1: memref<1x4x384xf32, #tpu.memory_space<vmem>>, %arg2: memref<1x1x384xi32, #tpu.memory_space<vmem>>, %arg3: memref<9x32x4xbf16, #tpu.memory_space<vmem>>, %arg4: memref<32x1xf32, #tpu.memory_space<vmem>>, %arg5: memref<4x32xbf16, #tpu.memory_space<vmem>>, %arg6: memref<4x1xf32, #tpu.memory_space<vmem>>, %arg7: memref<1x4x384xf32, #tpu.memory_space<vmem>>, %arg8: memref<1x1x1xf32, #tpu.memory_space<vmem>>, %arg9: memref<1x4x1xf32, #tpu.memory_space<vmem>>, %arg10: memref<1x4x1xf32, #tpu.memory_space<vmem>>, %arg11: memref<1x4x1xf32, #tpu.memory_space<vmem>>) attributes {dimension_semantics = [#tpu.dimension_semantics<parallel>], iteration_bounds = array<i64: 2>, scalar_prefetch = 0 : i64, scratch_operands = 0 : i64, tpu.core_type = #tpu.core_type<tc>, window_params = [{transform_indices = @transform_0, window_bounds = array<i64: 1, 4, 384>}, {transform_indices = @transform_1, window_bounds = array<i64: 1, 1, 384>}, {pipeline_mode = #tpu.pipeline_mode<synchronous>, transform_indices = @transform_2, window_bounds = array<i64: 9, 32, 4>}, {pipeline_mode = #tpu.pipeline_mode<synchronous>, transform_indices = @transform_3, window_bounds = array<i64: 32, 1>}, {pipeline_mode = #tpu.pipeline_mode<synchronous>, transform_indices = @transform_4, window_bounds = array<i64: 4, 32>}, {pipeline_mode = #tpu.pipeline_mode<synchronous>, transform_indices = @transform_5, window_bounds = array<i64: 4, 1>}, {transform_indices = @transform_6, window_bounds = array<i64: 1, 4, 384>}, {transform_indices = @transform_7, window_bounds = array<i64: 1, 1, 1>}, {transform_indices = @transform_8, window_bounds = array<i64: 1, 4, 1>}, {transform_indices = @transform_9, window_bounds = array<i64: 1, 4, 1>}, {transform_indices = @transform_10, window_bounds = array<i64: 1, 4, 1>}]} {
    %c0 = arith.constant 0 : index
    %c0_0 = arith.constant 0 : index
    %c0_1 = arith.constant 0 : index
    %0 = vector.load %arg1[%c0, %c0_0, %c0_1] : memref<1x4x384xf32, #tpu.memory_space<vmem>>, vector<1x4x384xf32>
    %1 = vector.shape_cast %0 : vector<1x4x384xf32> to vector<4x384xf32>
    %cst = arith.constant 0.000000e+00 : f32
    %2 = vector.broadcast %cst : f32 to vector<32x384xf32>
    %c19_i32 = arith.constant 19 : i32
    %3 = tpu.dynamic_rotate %1 by %c19_i32 dim 1 : vector<4x384xf32>, i32 -> vector<4x384xf32>
    %c0_2 = arith.constant 0 : index
    %c0_3 = arith.constant 0 : index
    %c0_4 = arith.constant 0 : index
    %4 = vector.load %arg3[%c0_2, %c0_3, %c0_4] : memref<9x32x4xbf16, #tpu.memory_space<vmem>>, vector<1x32x4xbf16>
    %5 = vector.shape_cast %4 : vector<1x32x4xbf16> to vector<32x4xbf16>
    %6 = arith.truncf %3 : vector<4x384xf32> to vector<4x384xbf16>
    %cst_5 = arith.constant dense<0.000000e+00> : vector<32x384xf32>
    %7 = tpu.matmul %5, %6, %cst_5 {dimension_numbers = #tpu.dot_dimension_numbers<[1], [0], [0], [1], [0, 0, 1, 1], [], []>} : vector<32x4xbf16>, vector<4x384xbf16>, vector<32x384xf32> -> vector<32x384xf32>
    %8 = arith.addf %2, %7 : vector<32x384xf32>
    %c18_i32 = arith.constant 18 : i32
    %9 = tpu.dynamic_rotate %1 by %c18_i32 dim 1 : vector<4x384xf32>, i32 -> vector<4x384xf32>
    %c1 = arith.constant 1 : index
    %c0_6 = arith.constant 0 : index
    %c0_7 = arith.constant 0 : index
    %10 = vector.load %arg3[%c1, %c0_6, %c0_7] : memref<9x32x4xbf16, #tpu.memory_space<vmem>>, vector<1x32x4xbf16>
    %11 = vector.shape_cast %10 : vector<1x32x4xbf16> to vector<32x4xbf16>
    %12 = arith.truncf %9 : vector<4x384xf32> to vector<4x384xbf16>
    %cst_8 = arith.constant dense<0.000000e+00> : vector<32x384xf32>
    %13 = tpu.matmul %11, %12, %cst_8 {dimension_numbers = #tpu.dot_dimension_numbers<[1], [0], [0], [1], [0, 0, 1, 1], [], []>} : vector<32x4xbf16>, vector<4x384xbf16>, vector<32x384xf32> -> vector<32x384xf32>
    %14 = arith.addf %8, %13 : vector<32x384xf32>
    %c17_i32 = arith.constant 17 : i32
    %15 = tpu.dynamic_rotate %1 by %c17_i32 dim 1 : vector<4x384xf32>, i32 -> vector<4x384xf32>
    %c2 = arith.constant 2 : index
    %c0_9 = arith.constant 0 : index
    %c0_10 = arith.constant 0 : index
    %16 = vector.load %arg3[%c2, %c0_9, %c0_10] : memref<9x32x4xbf16, #tpu.memory_space<vmem>>, vector<1x32x4xbf16>
    %17 = vector.shape_cast %16 : vector<1x32x4xbf16> to vector<32x4xbf16>
    %18 = arith.truncf %15 : vector<4x384xf32> to vector<4x384xbf16>
    %cst_11 = arith.constant dense<0.000000e+00> : vector<32x384xf32>
    %19 = tpu.matmul %17, %18, %cst_11 {dimension_numbers = #tpu.dot_dimension_numbers<[1], [0], [0], [1], [0, 0, 1, 1], [], []>} : vector<32x4xbf16>, vector<4x384xbf16>, vector<32x384xf32> -> vector<32x384xf32>
    %20 = arith.addf %14, %19 : vector<32x384xf32>
    %c1_i32 = arith.constant 1 : i32
    %21 = tpu.dynamic_rotate %1 by %c1_i32 dim 1 : vector<4x384xf32>, i32 -> vector<4x384xf32>
    %c3 = arith.constant 3 : index
    %c0_12 = arith.constant 0 : index
    %c0_13 = arith.constant 0 : index
    %22 = vector.load %arg3[%c3, %c0_12, %c0_13] : memref<9x32x4xbf16, #tpu.memory_space<vmem>>, vector<1x32x4xbf16>
    %23 = vector.shape_cast %22 : vector<1x32x4xbf16> to vector<32x4xbf16>
    %24 = arith.truncf %21 : vector<4x384xf32> to vector<4x384xbf16>
    %cst_14 = arith.constant dense<0.000000e+00> : vector<32x384xf32>
    %25 = tpu.matmul %23, %24, %cst_14 {dimension_numbers = #tpu.dot_dimension_numbers<[1], [0], [0], [1], [0, 0, 1, 1], [], []>} : vector<32x4xbf16>, vector<4x384xbf16>, vector<32x384xf32> -> vector<32x384xf32>
    %26 = arith.addf %20, %25 : vector<32x384xf32>
    %c4 = arith.constant 4 : index
    %c0_15 = arith.constant 0 : index
    %c0_16 = arith.constant 0 : index
    %27 = vector.load %arg3[%c4, %c0_15, %c0_16] : memref<9x32x4xbf16, #tpu.memory_space<vmem>>, vector<1x32x4xbf16>
    %28 = vector.shape_cast %27 : vector<1x32x4xbf16> to vector<32x4xbf16>
    %29 = arith.truncf %1 : vector<4x384xf32> to vector<4x384xbf16>
    %cst_17 = arith.constant dense<0.000000e+00> : vector<32x384xf32>
    %30 = tpu.matmul %28, %29, %cst_17 {dimension_numbers = #tpu.dot_dimension_numbers<[1], [0], [0], [1], [0, 0, 1, 1], [], []>} : vector<32x4xbf16>, vector<4x384xbf16>, vector<32x384xf32> -> vector<32x384xf32>
    %31 = arith.addf %26, %30 : vector<32x384xf32>
    %c383_i32 = arith.constant 383 : i32
    %32 = tpu.dynamic_rotate %1 by %c383_i32 dim 1 : vector<4x384xf32>, i32 -> vector<4x384xf32>
    %c5 = arith.constant 5 : index
    %c0_18 = arith.constant 0 : index
    %c0_19 = arith.constant 0 : index
    %33 = vector.load %arg3[%c5, %c0_18, %c0_19] : memref<9x32x4xbf16, #tpu.memory_space<vmem>>, vector<1x32x4xbf16>
    %34 = vector.shape_cast %33 : vector<1x32x4xbf16> to vector<32x4xbf16>
    %35 = arith.truncf %32 : vector<4x384xf32> to vector<4x384xbf16>
    %cst_20 = arith.constant dense<0.000000e+00> : vector<32x384xf32>
    %36 = tpu.matmul %34, %35, %cst_20 {dimension_numbers = #tpu.dot_dimension_numbers<[1], [0], [0], [1], [0, 0, 1, 1], [], []>} : vector<32x4xbf16>, vector<4x384xbf16>, vector<32x384xf32> -> vector<32x384xf32>
    %37 = arith.addf %31, %36 : vector<32x384xf32>
    %c367_i32 = arith.constant 367 : i32
    %38 = tpu.dynamic_rotate %1 by %c367_i32 dim 1 : vector<4x384xf32>, i32 -> vector<4x384xf32>
    %c6 = arith.constant 6 : index
    %c0_21 = arith.constant 0 : index
    %c0_22 = arith.constant 0 : index
    %39 = vector.load %arg3[%c6, %c0_21, %c0_22] : memref<9x32x4xbf16, #tpu.memory_space<vmem>>, vector<1x32x4xbf16>
    %40 = vector.shape_cast %39 : vector<1x32x4xbf16> to vector<32x4xbf16>
    %41 = arith.truncf %38 : vector<4x384xf32> to vector<4x384xbf16>
    %cst_23 = arith.constant dense<0.000000e+00> : vector<32x384xf32>
    %42 = tpu.matmul %40, %41, %cst_23 {dimension_numbers = #tpu.dot_dimension_numbers<[1], [0], [0], [1], [0, 0, 1, 1], [], []>} : vector<32x4xbf16>, vector<4x384xbf16>, vector<32x384xf32> -> vector<32x384xf32>
    %43 = arith.addf %37, %42 : vector<32x384xf32>
    %c366_i32 = arith.constant 366 : i32
    %44 = tpu.dynamic_rotate %1 by %c366_i32 dim 1 : vector<4x384xf32>, i32 -> vector<4x384xf32>
    %c7 = arith.constant 7 : index
    %c0_24 = arith.constant 0 : index
    %c0_25 = arith.constant 0 : index
    %45 = vector.load %arg3[%c7, %c0_24, %c0_25] : memref<9x32x4xbf16, #tpu.memory_space<vmem>>, vector<1x32x4xbf16>
    %46 = vector.shape_cast %45 : vector<1x32x4xbf16> to vector<32x4xbf16>
    %47 = arith.truncf %44 : vector<4x384xf32> to vector<4x384xbf16>
    %cst_26 = arith.constant dense<0.000000e+00> : vector<32x384xf32>
    %48 = tpu.matmul %46, %47, %cst_26 {dimension_numbers = #tpu.dot_dimension_numbers<[1], [0], [0], [1], [0, 0, 1, 1], [], []>} : vector<32x4xbf16>, vector<4x384xbf16>, vector<32x384xf32> -> vector<32x384xf32>
    %49 = arith.addf %43, %48 : vector<32x384xf32>
    %c365_i32 = arith.constant 365 : i32
    %50 = tpu.dynamic_rotate %1 by %c365_i32 dim 1 : vector<4x384xf32>, i32 -> vector<4x384xf32>
    %c8 = arith.constant 8 : index
    %c0_27 = arith.constant 0 : index
    %c0_28 = arith.constant 0 : index
    %51 = vector.load %arg3[%c8, %c0_27, %c0_28] : memref<9x32x4xbf16, #tpu.memory_space<vmem>>, vector<1x32x4xbf16>
    %52 = vector.shape_cast %51 : vector<1x32x4xbf16> to vector<32x4xbf16>
    %53 = arith.truncf %50 : vector<4x384xf32> to vector<4x384xbf16>
    %cst_29 = arith.constant dense<0.000000e+00> : vector<32x384xf32>
    %54 = tpu.matmul %52, %53, %cst_29 {dimension_numbers = #tpu.dot_dimension_numbers<[1], [0], [0], [1], [0, 0, 1, 1], [], []>} : vector<32x4xbf16>, vector<4x384xbf16>, vector<32x384xf32> -> vector<32x384xf32>
    %55 = arith.addf %49, %54 : vector<32x384xf32>
    %c0_30 = arith.constant 0 : index
    %c0_31 = arith.constant 0 : index
    %56 = vector.load %arg4[%c0_30, %c0_31] : memref<32x1xf32, #tpu.memory_space<vmem>>, vector<32x1xf32>
    %57 = vector.broadcast %56 : vector<32x1xf32> to vector<32x384xf32>
    %58 = arith.addf %55, %57 : vector<32x384xf32>
    %cst_32 = arith.constant 0.000000e+00 : f32
    %59 = vector.broadcast %cst_32 : f32 to vector<32x384xf32>
    %60 = arith.maximumf %58, %59 : vector<32x384xf32>
    %c0_33 = arith.constant 0 : index
    %c0_34 = arith.constant 0 : index
    %61 = vector.load %arg5[%c0_33, %c0_34] : memref<4x32xbf16, #tpu.memory_space<vmem>>, vector<4x32xbf16>
    %62 = arith.truncf %60 : vector<32x384xf32> to vector<32x384xbf16>
    %cst_35 = arith.constant dense<0.000000e+00> : vector<4x384xf32>
    %63 = tpu.matmul %61, %62, %cst_35 {dimension_numbers = #tpu.dot_dimension_numbers<[1], [0], [0], [1], [0, 0, 1, 1], [], []>} : vector<4x32xbf16>, vector<32x384xbf16>, vector<4x384xf32> -> vector<4x384xf32>
    %c0_36 = arith.constant 0 : index
    %c0_37 = arith.constant 0 : index
    %64 = vector.load %arg6[%c0_36, %c0_37] : memref<4x1xf32, #tpu.memory_space<vmem>>, vector<4x1xf32>
    %65 = vector.broadcast %64 : vector<4x1xf32> to vector<4x384xf32>
    %66 = arith.addf %63, %65 : vector<4x384xf32>
    %c0_38 = arith.constant 0 : index
    %c0_39 = arith.constant 0 : index
    %c0_40 = arith.constant 0 : index
    %67 = vector.load %arg7[%c0_38, %c0_39, %c0_40] : memref<1x4x384xf32, #tpu.memory_space<vmem>>, vector<1x4x384xf32>
    %68 = vector.shape_cast %67 : vector<1x4x384xf32> to vector<4x384xf32>
    %69 = vector.shape_cast %66 : vector<4x384xf32> to vector<1x4x384xf32>
    tpu.vector_store %arg7[%c0_38, %c0_39, %c0_40], %69 {strides = array<i32>} : memref<1x4x384xf32, #tpu.memory_space<vmem>>, vector<1x4x384xf32>,
    %c0_41 = arith.constant 0 : index
    %c0_42 = arith.constant 0 : index
    %c0_43 = arith.constant 0 : index
    %70 = vector.load %arg2[%c0_41, %c0_42, %c0_43] : memref<1x1x384xi32, #tpu.memory_space<vmem>>, vector<1x1x384xi32>
    %71 = vector.shape_cast %70 : vector<1x1x384xi32> to vector<1x384xi32>
    %c0_i32 = arith.constant 0 : i32
    %72 = vector.broadcast %c0_i32 : i32 to vector<1x384xi32>
    %73 = arith.cmpi sge, %71, %72 : vector<1x384xi32>
    %74 = arith.extui %73 : vector<1x384xi1> to vector<1x384xi32>
    %75 = arith.sitofp %74 : vector<1x384xi32> to vector<1x384xf32>
    %76 = tpu.iota {dimensions = array<i32: 0>} : vector<4x384xi32>
    %77 = vector.broadcast %71 : vector<1x384xi32> to vector<4x384xi32>
    %78 = arith.cmpi eq, %77, %76 : vector<4x384xi32>
    %79 = arith.extui %78 : vector<4x384xi1> to vector<4x384xi32>
    %80 = arith.sitofp %79 : vector<4x384xi32> to vector<4x384xf32>
    %cst_44 = arith.constant dense<0xFF800000> : vector<384xf32>
    %81 = vector.multi_reduction <maximumf>, %66, %cst_44 [0] : vector<4x384xf32> to vector<384xf32>
    %82 = vector.shape_cast %81 : vector<384xf32> to vector<1x384xf32>
    %83 = vector.broadcast %82 : vector<1x384xf32> to vector<4x384xf32>
    %84 = arith.subf %66, %83 : vector<4x384xf32>
    %85 = math.exp %84 : vector<4x384xf32>
    %cst_45 = arith.constant dense<0.000000e+00> : vector<384xf32>
    %86 = vector.multi_reduction <add>, %85, %cst_45 [0] : vector<4x384xf32> to vector<384xf32>
    %87 = vector.shape_cast %86 : vector<384xf32> to vector<1x384xf32>
    %88 = math.log %87 : vector<1x384xf32>
    %89 = vector.broadcast %88 : vector<1x384xf32> to vector<4x384xf32>
    %90 = arith.subf %84, %89 : vector<4x384xf32>
    %91 = tpu.reciprocal %87 {approx = true} : vector<1x384xf32> -> vector<1x384xf32>
    %92 = vector.broadcast %91 : vector<1x384xf32> to vector<4x384xf32>
    %93 = arith.mulf %85, %92 : vector<4x384xf32>
    %cst_46 = arith.constant 0.000000e+00 : f32
    %94 = vector.broadcast %cst_46 : f32 to vector<4x384xf32>
    %95 = arith.subf %94, %80 : vector<4x384xf32>
    %96 = arith.mulf %95, %90 : vector<4x384xf32>
    %cst_47 = arith.constant dense<0.000000e+00> : vector<4xf32>
    %97 = vector.multi_reduction <add>, %96, %cst_47 [1] : vector<4x384xf32> to vector<4xf32>
    %98 = vector.shape_cast %97 : vector<4xf32> to vector<4x1xf32>
    %cst_48 = arith.constant dense<0.000000e+00> : vector<1xf32>
    %99 = vector.multi_reduction <add>, %98, %cst_48 [0] : vector<4x1xf32> to vector<1xf32>
    %100 = vector.shape_cast %99 : vector<1xf32> to vector<1x1xf32>
    %c0_49 = arith.constant 0 : index
    %c0_50 = arith.constant 0 : index
    %c0_51 = arith.constant 0 : index
    %101 = vector.load %arg8[%c0_49, %c0_50, %c0_51] : memref<1x1x1xf32, #tpu.memory_space<vmem>>, vector<1x1x1xf32>
    %102 = vector.shape_cast %101 : vector<1x1x1xf32> to vector<1x1xf32>
    %103 = vector.shape_cast %100 : vector<1x1xf32> to vector<1x1x1xf32>
    tpu.vector_store %arg8[%c0_49, %c0_50, %c0_51], %103 {strides = array<i32>} : memref<1x1x1xf32, #tpu.memory_space<vmem>>, vector<1x1x1xf32>,
    %104 = arith.mulf %93, %80 : vector<4x384xf32>
    %cst_52 = arith.constant dense<0.000000e+00> : vector<4xf32>
    %105 = vector.multi_reduction <add>, %104, %cst_52 [1] : vector<4x384xf32> to vector<4xf32>
    %106 = vector.shape_cast %105 : vector<4xf32> to vector<4x1xf32>
    %c0_53 = arith.constant 0 : index
    %c0_54 = arith.constant 0 : index
    %c0_55 = arith.constant 0 : index
    %107 = vector.load %arg9[%c0_53, %c0_54, %c0_55] : memref<1x4x1xf32, #tpu.memory_space<vmem>>, vector<1x4x1xf32>
    %108 = vector.shape_cast %107 : vector<1x4x1xf32> to vector<4x1xf32>
    %109 = vector.shape_cast %106 : vector<4x1xf32> to vector<1x4x1xf32>
    tpu.vector_store %arg9[%c0_53, %c0_54, %c0_55], %109 {strides = array<i32>} : memref<1x4x1xf32, #tpu.memory_space<vmem>>, vector<1x4x1xf32>,
    %110 = vector.broadcast %75 : vector<1x384xf32> to vector<4x384xf32>
    %111 = arith.mulf %93, %110 : vector<4x384xf32>
    %cst_56 = arith.constant dense<0.000000e+00> : vector<4xf32>
    %112 = vector.multi_reduction <add>, %111, %cst_56 [1] : vector<4x384xf32> to vector<4xf32>
    %113 = vector.shape_cast %112 : vector<4xf32> to vector<4x1xf32>
    %c0_57 = arith.constant 0 : index
    %c0_58 = arith.constant 0 : index
    %c0_59 = arith.constant 0 : index
    %114 = vector.load %arg10[%c0_57, %c0_58, %c0_59] : memref<1x4x1xf32, #tpu.memory_space<vmem>>, vector<1x4x1xf32>
    %115 = vector.shape_cast %114 : vector<1x4x1xf32> to vector<4x1xf32>
    %116 = vector.shape_cast %113 : vector<4x1xf32> to vector<1x4x1xf32>
    tpu.vector_store %arg10[%c0_57, %c0_58, %c0_59], %116 {strides = array<i32>} : memref<1x4x1xf32, #tpu.memory_space<vmem>>, vector<1x4x1xf32>,
    %cst_60 = arith.constant dense<0.000000e+00> : vector<4xf32>
    %117 = vector.multi_reduction <add>, %80, %cst_60 [1] : vector<4x384xf32> to vector<4xf32>
    %118 = vector.shape_cast %117 : vector<4xf32> to vector<4x1xf32>
    %c0_61 = arith.constant 0 : index
    %c0_62 = arith.constant 0 : index
    %c0_63 = arith.constant 0 : index
    %119 = vector.load %arg11[%c0_61, %c0_62, %c0_63] : memref<1x4x1xf32, #tpu.memory_space<vmem>>, vector<1x4x1xf32>
    %120 = vector.shape_cast %119 : vector<1x4x1xf32> to vector<4x1xf32>
    %121 = vector.shape_cast %118 : vector<4x1xf32> to vector<1x4x1xf32>
    tpu.vector_store %arg11[%c0_61, %c0_62, %c0_63], %121 {strides = array<i32>} : memref<1x4x1xf32, #tpu.memory_space<vmem>>, vector<1x4x1xf32>,
    return
  }
  func.func @transform_0(%arg0: i32) -> (i32, i32, i32) {
    %c0_i32 = arith.constant 0 : i32
    %c0_i32_0 = arith.constant 0 : i32
    %c0_i32_1 = arith.constant 0 : i32
    return %arg0, %c0_i32, %c0_i32_0 : i32, i32, i32
  }
  func.func @transform_1(%arg0: i32) -> (i32, i32, i32) {
    %c0_i32 = arith.constant 0 : i32
    %c0_i32_0 = arith.constant 0 : i32
    %c0_i32_1 = arith.constant 0 : i32
    return %arg0, %c0_i32, %c0_i32_0 : i32, i32, i32
  }
  func.func @transform_2(%arg0: i32) -> (i32, i32, i32) {
    %c0_i32 = arith.constant 0 : i32
    %c0_i32_0 = arith.constant 0 : i32
    %c0_i32_1 = arith.constant 0 : i32
    %c0_i32_2 = arith.constant 0 : i32
    return %c0_i32, %c0_i32_0, %c0_i32_1 : i32, i32, i32
  }
  func.func @transform_3(%arg0: i32) -> (i32, i32) {
    %c0_i32 = arith.constant 0 : i32
    %c0_i32_0 = arith.constant 0 : i32
    %c0_i32_1 = arith.constant 0 : i32
    return %c0_i32, %c0_i32_0 : i32, i32
  }
  func.func @transform_4(%arg0: i32) -> (i32, i32) {
    %c0_i32 = arith.constant 0 : i32
    %c0_i32_0 = arith.constant 0 : i32
    %c0_i32_1 = arith.constant 0 : i32
    return %c0_i32, %c0_i32_0 : i32, i32
  }
  func.func @transform_5(%arg0: i32) -> (i32, i32) {
    %c0_i32 = arith.constant 0 : i32
    %c0_i32_0 = arith.constant 0 : i32
    %c0_i32_1 = arith.constant 0 : i32
    return %c0_i32, %c0_i32_0 : i32, i32
  }
  func.func @transform_6(%arg0: i32) -> (i32, i32, i32) {
    %c0_i32 = arith.constant 0 : i32
    %c0_i32_0 = arith.constant 0 : i32
    %c0_i32_1 = arith.constant 0 : i32
    return %arg0, %c0_i32, %c0_i32_0 : i32, i32, i32
  }
  func.func @transform_7(%arg0: i32) -> (i32, i32, i32) {
    %c0_i32 = arith.constant 0 : i32
    %c0_i32_0 = arith.constant 0 : i32
    %c0_i32_1 = arith.constant 0 : i32
    return %arg0, %c0_i32, %c0_i32_0 : i32, i32, i32
  }
  func.func @transform_8(%arg0: i32) -> (i32, i32, i32) {
    %c0_i32 = arith.constant 0 : i32
    %c0_i32_0 = arith.constant 0 : i32
    %c0_i32_1 = arith.constant 0 : i32
    return %arg0, %c0_i32, %c0_i32_0 : i32, i32, i32
  }
  func.func @transform_9(%arg0: i32) -> (i32, i32, i32) {
    %c0_i32 = arith.constant 0 : i32
    %c0_i32_0 = arith.constant 0 : i32
    %c0_i32_1 = arith.constant 0 : i32
    return %arg0, %c0_i32, %c0_i32_0 : i32, i32, i32
  }
  func.func @transform_10(%arg0: i32) -> (i32, i32, i32) {
    %c0_i32 = arith.constant 0 : i32
    %c0_i32_0 = arith.constant 0 : i32
    %c0_i32_1 = arith.constant 0 : i32
    return %arg0, %c0_i32, %c0_i32_0 : i32, i32, i32
  }
}

</mosaic_0001>

<llo_original>
// kernel: network_wrapper_forward.1
$region0: #{network_wrapper_forward.1}
  #allocation0 [shape = 'u32[]', space=smem, size = 0x4, offset = 0x4, fixed_abs, tag = 'smem constant byte address 0x4 - core index']
  #allocation1 [shape = 'u32[144,128]{1,0:T(1,128)}', space=vmem, size = 0x12000, scoped, tag = 'internal scratch']
  %s0 = inlined_call_operand.vmem [shape: f32[2,4,384], index: 0, kind: input, shape index: {}]
  %s1 = inlined_call_operand.vmem [shape: s32[2,1,384], index: 1, kind: input, shape index: {}]
  %s2 = inlined_call_operand.vmem [shape: bf16[9,32,4], index: 2, kind: input, shape index: {}]
  %s3 = inlined_call_operand.vmem [shape: f32[32,1], index: 3, kind: input, shape index: {}]
  %s4 = inlined_call_operand.vmem [shape: bf16[4,32], index: 4, kind: input, shape index: {}]
  %s5 = inlined_call_operand.vmem [shape: f32[4,1], index: 5, kind: input, shape index: {}]
  %s6 = inlined_call_operand.vmem [shape: f32[2,4,384], index: 6, kind: output, shape index: {0}]
  %s7 = inlined_call_operand.vmem [shape: f32[2,1,1], index: 7, kind: output, shape index: {1}]
  %s8 = inlined_call_operand.vmem [shape: f32[2,4,1], index: 8, kind: output, shape index: {2}]
  %s9 = inlined_call_operand.vmem [shape: f32[2,4,1], index: 9, kind: output, shape index: {3}]
  %s10 = inlined_call_operand.vmem [shape: f32[2,4,1], index: 10, kind: output, shape index: {4}]
  %11 = xla_tuple %s6, %s7, %s8, %s9, %s10
  %s12 = sld [smem:[#allocation0]]
  $region89: #{network_wrapper_forward.1} parent=0
    _
  %s14 = ssub.s32 1, %s12
  %s15 = scalar_select 0, %s14, %s12
  loop: start=0, step=1, limit=4
  $region2: #{network_wrapper_forward.1} parent=0 // loop_pre_header
    _
  $region3: #{network_wrapper_forward.1} parent=0 // loop_header
    %s17 = sphi 0, %s21
    %p18 = scmp.ge.s32.totalorder %s17, 4
    %s27 = sphi 0, %s29
    %s30 = sphi 0, %s27
    %s31 = sphi 0, %s30
    %s47 = sphi 0, %s31
    %s53 = sphi 0, %s55
    %s56 = sphi 0, %s53
    %s57 = sphi 0, %s56
    %s73 = sphi 0, %s57
    %s77 = sphi 0, %s77
    %s79 = sphi 0, %s77
    %s80 = sphi 0, %s79
    %s94 = sphi 0, %s80
    %s98 = sphi 0, %s98
    %s100 = sphi 0, %s98
    %s101 = sphi 0, %s100
    %s115 = sphi 0, %s101
    %s119 = sphi 0, %s119
    %s121 = sphi 0, %s119
    %s122 = sphi 0, %s121
    %s136 = sphi 0, %s122
    %s140 = sphi 0, %s140
    %s142 = sphi 0, %s140
    %s143 = sphi 0, %s142
    %s157 = sphi 0, %s143
    %s163 = sphi 0, %s165
    %s166 = sphi 0, %s163
    %s167 = sphi 0, %s166
    %s183 = sphi 0, %s167
    %s189 = sphi 0, %s191
    %s192 = sphi 0, %s189
    %s193 = sphi 0, %s192
    %s209 = sphi 0, %s193
    %s215 = sphi 0, %s217
    %s218 = sphi 0, %s215
    %s219 = sphi 0, %s218
    %s235 = sphi 0, %s219
    %s241 = sphi 0, %s243
    %s244 = sphi 0, %s241
    %s245 = sphi 0, %s244
    %s261 = sphi 0, %s245
    %s267 = sphi 0, %s269
    %s270 = sphi 0, %s267
    %s271 = sphi 0, %s270
    %s287 = sphi 0, %s271
  $region4: #{network_wrapper_forward.1} parent=0 // loop_header_branch
    %20 = sbr.rel (%p18) target = $region8
  $region5: #{network_wrapper_forward.1} parent=0 // loop_body
    %s22 = ssub.s32 %s17, 1
    %s23 = ssub.s32 %s17, 2
    %s24 = sadd.s32 %s17, 1
    %s25 = ssub.s32 %s17, %s24
    %p26 = scmp.eq.s32.totalorder %s25, 0
    %s28 = sadd.s32 %s27, 1
    %s29 = scalar_select %p26, %s27, %s28
    %p32 = pneg %p26
    %p33 = scmp.eq.s32.totalorder %s17, 1
    %p34 = por %p32, %p33
    %p35 = scmp.ne.s32.totalorder %s27, %s30
    %p36 = scmp.eq.s32.totalorder %s17, 0
    %p37 = por %p35, %p36
    %p38 = scmp.ne.s32.totalorder %s27, %s30
    %p39 = scmp.eq.s32.totalorder %s22, 1
    %p40 = por %p38, %p39
    %p41 = scmp.ne.s32.totalorder %s30, %s31
    %p42 = scmp.eq.s32.totalorder %s22, 0
    %p43 = por %p41, %p42
    %p44 = scmp.ne.s32.totalorder %s30, %s31
    %p45 = scmp.eq.s32.totalorder %s23, 1
    %p46 = por %p44, %p45
    %p48 = scmp.ne.s32.totalorder %s31, %s47
    %p49 = scmp.eq.s32.totalorder %s23, 0
    %p50 = por %p48, %p49
    %s51 = ssub.s32 %s17, %s24
    %p52 = scmp.eq.s32.totalorder %s51, 0
    %s54 = sadd.s32 %s53, 1
    %s55 = scalar_select %p52, %s53, %s54
    %p58 = pneg %p52
    %p59 = scmp.eq.s32.totalorder %s17, 1
    %p60 = por %p58, %p59
    %p61 = scmp.ne.s32.totalorder %s53, %s56
    %p62 = scmp.eq.s32.totalorder %s17, 0
    %p63 = por %p61, %p62
    %p64 = scmp.ne.s32.totalorder %s53, %s56
    %p65 = scmp.eq.s32.totalorder %s22, 1
    %p66 = por %p64, %p65
    %p67 = scmp.ne.s32.totalorder %s56, %s57
    %p68 = scmp.eq.s32.totalorder %s22, 0
    %p69 = por %p67, %p68
    %p70 = scmp.ne.s32.totalorder %s56, %s57
    %p71 = scmp.eq.s32.totalorder %s23, 1
    %p72 = por %p70, %p71
    %p74 = scmp.ne.s32.totalorder %s57, %s73
    %p75 = scmp.eq.s32.totalorder %s23, 0
    %p76 = por %p74, %p75
    %s78 = sadd.s32 %s77, 1
    %p81 = scmp.eq.s32.totalorder %s17, 1
    %p82 = scmp.ne.s32.totalorder %s77, %s79
    %p83 = scmp.eq.s32.totalorder %s17, 0
    %p84 = por %p82, %p83
    %p85 = scmp.ne.s32.totalorder %s77, %s79
    %p86 = scmp.eq.s32.totalorder %s22, 1
    %p87 = por %p85, %p86
    %p88 = scmp.ne.s32.totalorder %s79, %s80
    %p89 = scmp.eq.s32.totalorder %s22, 0
    %p90 = por %p88, %p89
    %p91 = scmp.ne.s32.totalorder %s79, %s80
    %p92 = scmp.eq.s32.totalorder %s23, 1
    %p93 = por %p91, %p92
    %p95 = scmp.ne.s32.totalorder %s80, %s94
    %p96 = scmp.eq.s32.totalorder %s23, 0
    %p97 = por %p95, %p96
    %s99 = sadd.s32 %s98, 1
    %p102 = scmp.eq.s32.totalorder %s17, 1
    %p103 = scmp.ne.s32.totalorder %s98, %s100
    %p104 = scmp.eq.s32.totalorder %s17, 0
    %p105 = por %p103, %p104
    %p106 = scmp.ne.s32.totalorder %s98, %s100
    %p107 = scmp.eq.s32.totalorder %s22, 1
    %p108 = por %p106, %p107
    %p109 = scmp.ne.s32.totalorder %s100, %s101
    %p110 = scmp.eq.s32.totalorder %s22, 0
    %p111 = por %p109, %p110
    %p112 = scmp.ne.s32.totalorder %s100, %s101
    %p113 = scmp.eq.s32.totalorder %s23, 1
    %p114 = por %p112, %p113
    %p116 = scmp.ne.s32.totalorder %s101, %s115
    %p117 = scmp.eq.s32.totalorder %s23, 0
    %p118 = por %p116, %p117
    %s120 = sadd.s32 %s119, 1
    %p123 = scmp.eq.s32.totalorder %s17, 1
    %p124 = scmp.ne.s32.totalorder %s119, %s121
    %p125 = scmp.eq.s32.totalorder %s17, 0
    %p126 = por %p124, %p125
    %p127 = scmp.ne.s32.totalorder %s119, %s121
    %p128 = scmp.eq.s32.totalorder %s22, 1
    %p129 = por %p127, %p128
    %p130 = scmp.ne.s32.totalorder %s121, %s122
    %p131 = scmp.eq.s32.totalorder %s22, 0
    %p132 = por %p130, %p131
    %p133 = scmp.ne.s32.totalorder %s121, %s122
    %p134 = scmp.eq.s32.totalorder %s23, 1
    %p135 = por %p133, %p134
    %p137 = scmp.ne.s32.totalorder %s122, %s136
    %p138 = scmp.eq.s32.totalorder %s23, 0
    %p139 = por %p137, %p138
    %s141 = sadd.s32 %s140, 1
    %p144 = scmp.eq.s32.totalorder %s17, 1
    %p145 = scmp.ne.s32.totalorder %s140, %s142
    %p146 = scmp.eq.s32.totalorder %s17, 0
    %p147 = por %p145, %p146
    %p148 = scmp.ne.s32.totalorder %s140, %s142
    %p149 = scmp.eq.s32.totalorder %s22, 1
    %p150 = por %p148, %p149
    %p151 = scmp.ne.s32.totalorder %s142, %s143
    %p152 = scmp.eq.s32.totalorder %s22, 0
    %p153 = por %p151, %p152
    %p154 = scmp.ne.s32.totalorder %s142, %s143
    %p155 = scmp.eq.s32.totalorder %s23, 1
    %p156 = por %p154, %p155
    %p158 = scmp.ne.s32.totalorder %s143, %s157
    %p159 = scmp.eq.s32.totalorder %s23, 0
    %p160 = por %p158, %p159
    %s161 = ssub.s32 %s17, %s24
    %p162 = scmp.eq.s32.totalorder %s161, 0
    %s164 = sadd.s32 %s163, 1
    %s165 = scalar_select %p162, %s163, %s164
    %p168 = pneg %p162
    %p169 = scmp.eq.s32.totalorder %s17, 1
    %p170 = por %p168, %p169
    %p171 = scmp.ne.s32.totalorder %s163, %s166
    %p172 = scmp.eq.s32.totalorder %s17, 0
    %p173 = por %p171, %p172
    %p174 = scmp.ne.s32.totalorder %s163, %s166
    %p175 = scmp.eq.s32.totalorder %s22, 1
    %p176 = por %p174, %p175
    %p177 = scmp.ne.s32.totalorder %s166, %s167
    %p178 = scmp.eq.s32.totalorder %s22, 0
    %p179 = por %p177, %p178
    %p180 = scmp.ne.s32.totalorder %s166, %s167
    %p181 = scmp.eq.s32.totalorder %s23, 1
    %p182 = por %p180, %p181
    %p184 = scmp.ne.s32.totalorder %s167, %s183
    %p185 = scmp.eq.s32.totalorder %s23, 0
    %p186 = por %p184, %p185
    %s187 = ssub.s32 %s17, %s24
    %p188 = scmp.eq.s32.totalorder %s187, 0
    %s190 = sadd.s32 %s189, 1
    %s191 = scalar_select %p188, %s189, %s190
    %p194 = pneg %p188
    %p195 = scmp.eq.s32.totalorder %s17, 1
    %p196 = por %p194, %p195
    %p197 = scmp.ne.s32.totalorder %s189, %s192
    %p198 = scmp.eq.s32.totalorder %s17, 0
    %p199 = por %p197, %p198
    %p200 = scmp.ne.s32.totalorder %s189, %s192
    %p201 = scmp.eq.s32.totalorder %s22, 1
    %p202 = por %p200, %p201
    %p203 = scmp.ne.s32.totalorder %s192, %s193
    %p204 = scmp.eq.s32.totalorder %s22, 0
    %p205 = por %p203, %p204
    %p206 = scmp.ne.s32.totalorder %s192, %s193
    %p207 = scmp.eq.s32.totalorder %s23, 1
    %p208 = por %p206, %p207
    %p210 = scmp.ne.s32.totalorder %s193, %s209
    %p211 = scmp.eq.s32.totalorder %s23, 0
    %p212 = por %p210, %p211
    %s213 = ssub.s32 %s17, %s24
    %p214 = scmp.eq.s32.totalorder %s213, 0
    %s216 = sadd.s32 %s215, 1
    %s217 = scalar_select %p214, %s215, %s216
    %p220 = pneg %p214
    %p221 = scmp.eq.s32.totalorder %s17, 1
    %p222 = por %p220, %p221
    %p223 = scmp.ne.s32.totalorder %s215, %s218
    %p224 = scmp.eq.s32.totalorder %s17, 0
    %p225 = por %p223, %p224
    %p226 = scmp.ne.s32.totalorder %s215, %s218
    %p227 = scmp.eq.s32.totalorder %s22, 1
    %p228 = por %p226, %p227
    %p229 = scmp.ne.s32.totalorder %s218, %s219
    %p230 = scmp.eq.s32.totalorder %s22, 0
    %p231 = por %p229, %p230
    %p232 = scmp.ne.s32.totalorder %s218, %s219
    %p233 = scmp.eq.s32.totalorder %s23, 1
    %p234 = por %p232, %p233
    %p236 = scmp.ne.s32.totalorder %s219, %s235
    %p237 = scmp.eq.s32.totalorder %s23, 0
    %p238 = por %p236, %p237
    %s239 = ssub.s32 %s17, %s24
    %p240 = scmp.eq.s32.totalorder %s239, 0
    %s242 = sadd.s32 %s241, 1
    %s243 = scalar_select %p240, %s241, %s242
    %p246 = pneg %p240
    %p247 = scmp.eq.s32.totalorder %s17, 1
    %p248 = por %p246, %p247
    %p249 = scmp.ne.s32.totalorder %s241, %s244
    %p250 = scmp.eq.s32.totalorder %s17, 0
    %p251 = por %p249, %p250
    %p252 = scmp.ne.s32.totalorder %s241, %s244
    %p253 = scmp.eq.s32.totalorder %s22, 1
    %p254 = por %p252, %p253
    %p255 = scmp.ne.s32.totalorder %s244, %s245
    %p256 = scmp.eq.s32.totalorder %s22, 0
    %p257 = por %p255, %p256
    %p258 = scmp.ne.s32.totalorder %s244, %s245
    %p259 = scmp.eq.s32.totalorder %s23, 1
    %p260 = por %p258, %p259
    %p262 = scmp.ne.s32.totalorder %s245, %s261
    %p263 = scmp.eq.s32.totalorder %s23, 0
    %p264 = por %p262, %p263
    %s265 = ssub.s32 %s17, %s24
    %p266 = scmp.eq.s32.totalorder %s265, 0
    %s268 = sadd.s32 %s267, 1
    %s269 = scalar_select %p266, %s267, %s268
    %p272 = pneg %p266
    %p273 = scmp.eq.s32.totalorder %s17, 1
    %p274 = por %p272, %p273
    %p275 = scmp.ne.s32.totalorder %s267, %s270
    %p276 = scmp.eq.s32.totalorder %s17, 0
    %p277 = por %p275, %p276
    %p278 = scmp.ne.s32.totalorder %s267, %s270
    %p279 = scmp.eq.s32.totalorder %s22, 1
    %p280 = por %p278, %p279
    %p281 = scmp.ne.s32.totalorder %s270, %s271
    %p282 = scmp.eq.s32.totalorder %s22, 0
    %p283 = por %p281, %p282
    %p284 = scmp.ne.s32.totalorder %s270, %s271
    %p285 = scmp.eq.s32.totalorder %s23, 1
    %p286 = por %p284, %p285
    %p288 = scmp.ne.s32.totalorder %s271, %s287
    %p289 = scmp.eq.s32.totalorder %s23, 0
    %p290 = por %p288, %p289
    %p291 = scmp.le.s32.totalorder 1, %s17
    %p292 = scmp.lt.s32.totalorder %s17, 3
    %p293 = pnand %p291, %p292
    %p294 = pneg %p293
    // Predicated region
    $region9: #{network_wrapper_forward.1} parent=5 // pred_check
      _
    $region10: #{network_wrapper_forward.1} parent=5 // pred_check_branch
      %296 = sbr.rel (%p293) target = $region12
    $region11: #{network_wrapper_forward.1} parent=5 // pred_region
      %s297 = ssub.s32 %s17, 1
      // Predicated region
      $region13: #{network_wrapper_forward.1} parent=11 // pred_check
        %p298 = pneg %p90
      $region14: #{network_wrapper_forward.1} parent=11 // pred_check_branch
        %300 = sbr.rel (%p298) target = $region16
      $region15: #{network_wrapper_forward.1} parent=11 // pred_region
        _
      $region16: #{network_wrapper_forward.1} parent=11 // pred_fallthru
        _
      // Predicated region
      $region17: #{network_wrapper_forward.1} parent=11 // pred_check
        %p301 = pneg %p111
      $region18: #{network_wrapper_forward.1} parent=11 // pred_check_branch
        %303 = sbr.rel (%p301) target = $region20
      $region19: #{network_wrapper_forward.1} parent=11 // pred_region
        _
      $region20: #{network_wrapper_forward.1} parent=11 // pred_fallthru
        _
      // Predicated region
      $region21: #{network_wrapper_forward.1} parent=11 // pred_check
        %p304 = pneg %p132
      $region22: #{network_wrapper_forward.1} parent=11 // pred_check_branch
        %306 = sbr.rel (%p304) target = $region24
      $region23: #{network_wrapper_forward.1} parent=11 // pred_region
        _
      $region24: #{network_wrapper_forward.1} parent=11 // pred_fallthru
        _
      // Predicated region
      $region25: #{network_wrapper_forward.1} parent=11 // pred_check
        %p307 = pneg %p153
      $region26: #{network_wrapper_forward.1} parent=11 // pred_check_branch
        %309 = sbr.rel (%p307) target = $region28
      $region27: #{network_wrapper_forward.1} parent=11 // pred_region
        _
      $region28: #{network_wrapper_forward.1} parent=11 // pred_fallthru
        _
    $region12: #{network_wrapper_forward.1} parent=5 // pred_fallthru
      _
    %p310 = scmp.lt.s32.totalorder %s17, 2
    // Predicated region
    $region29: #{network_wrapper_forward.1} parent=5 // pred_check
      %p311 = pneg %p310
    $region30: #{network_wrapper_forward.1} parent=5 // pred_check_branch
      %313 = sbr.rel (%p311) target = $region32
    $region31: #{network_wrapper_forward.1} parent=5 // pred_region
      // Predicated region
      $region33: #{network_wrapper_forward.1} parent=31 // pred_check
        %p314 = pneg %p37
      $region34: #{network_wrapper_forward.1} parent=31 // pred_check_branch
        %316 = sbr.rel (%p314) target = $region36
      $region35: #{network_wrapper_forward.1} parent=31 // pred_region
        %p317 = scmp.lt.s32.totalorder %s17, 1
        %s318 = scalar_select %p317, %s17, 1
        %s319 = smul.addr %s318, 3
        %s320 = smul.addr %s319, 4
        %s321 = scalar_lea.vmem %s0, %s320
      $region36: #{network_wrapper_forward.1} parent=31 // pred_fallthru
        _
      // Predicated region
      $region37: #{network_wrapper_forward.1} parent=31 // pred_check
        %p322 = pneg %p63
      $region38: #{network_wrapper_forward.1} parent=31 // pred_check_branch
        %324 = sbr.rel (%p322) target = $region40
      $region39: #{network_wrapper_forward.1} parent=31 // pred_region
        %p325 = scmp.lt.s32.totalorder %s17, 1
        %s326 = scalar_select %p325, %s17, 1
        %s327 = smul.addr %s326, 3
        %s328 = scalar_lea.vmem %s1, %s327
      $region40: #{network_wrapper_forward.1} parent=31 // pred_fallthru
        _
    $region32: #{network_wrapper_forward.1} parent=5 // pred_fallthru
      _
    %p329 = scmp.le.s32.totalorder 1, %s17
    %p330 = scmp.lt.s32.totalorder %s17, 3
    %p331 = pnand %p329, %p330
    %p332 = pneg %p331
    // Predicated region
    $region41: #{network_wrapper_forward.1} parent=5 // pred_check
      _
    $region42: #{network_wrapper_forward.1} parent=5 // pred_check_branch
      %334 = sbr.rel (%p331) target = $region44
    $region43: #{network_wrapper_forward.1} parent=5 // pred_region
      %s335 = ssub.s32 %s17, 1
      %p336 = scmp.lt.s32.totalorder %s22, 1
      %s337 = scalar_select %p336, %s22, 1
      %s338 = smul.addr %s337, 3
      %s339 = smul.addr %s338, 4
      %s340 = scalar_lea.vmem %s0, %s339
      %p341 = pneg %p43
      %p342 = pneg %p40
      %p343 = scmp.lt.s32.totalorder %s22, 1
      %s344 = scalar_select %p343, %s22, 1
      %s345 = smul.addr %s344, 3
      %s346 = scalar_lea.vmem %s1, %s345
      %p347 = pneg %p69
      %p348 = pneg %p66
      %p349 = pneg %p90
      %p350 = pneg %p87
      %p351 = pneg %p111
      %p352 = pneg %p108
      %p353 = pneg %p132
      %p354 = pneg %p129
      %p355 = pneg %p153
      %p356 = pneg %p150
      %p357 = pneg %p179
      %p358 = pneg %p176
      %p359 = scmp.lt.s32.totalorder %s22, 1
      %s360 = scalar_select %p359, %s22, 1
      %s361 = smul.addr %s360, 3
      %s362 = smul.addr %s361, 4
      %s363 = scalar_lea.vmem %s6, %s362
      %p364 = pneg %p205
      %p365 = pneg %p202
      %p366 = scmp.lt.s32.totalorder %s22, 1
      %s367 = scalar_select %p366, %s22, 1
      %s368 = scalar_lea.vmem %s7, %s367
      %p369 = pneg %p231
      %p370 = pneg %p228
      %p371 = scmp.lt.s32.totalorder %s22, 1
      %s372 = scalar_select %p371, %s22, 1
      %s373 = smul.addr %s372, 4
      %s374 = scalar_lea.vmem %s8, %s373
      %p375 = pneg %p257
      %p376 = pneg %p254
      %p377 = scmp.lt.s32.totalorder %s22, 1
      %s378 = scalar_select %p377, %s22, 1
      %s379 = smul.addr %s378, 4
      %s380 = scalar_lea.vmem %s9, %s379
      %p381 = pneg %p283
      %p382 = pneg %p280
      %p383 = scmp.lt.s32.totalorder %s22, 1
      %s384 = scalar_select %p383, %s22, 1
      %s385 = smul.addr %s384, 4
      %s386 = scalar_lea.vmem %s10, %s385
      %p387 = scmp.lt.s32.totalorder %s22, 1
      %s388 = scalar_select %p387, %s22, 1
      %s389 = smul.addr %s388, 3
      %s390 = smul.addr %s389, 4
      %s391 = scalar_lea.vmem %s0, %s390
      %p392 = scmp.lt.s32.totalorder %s22, 1
      %s393 = scalar_select %p392, %s22, 1
      %s394 = smul.addr %s393, 3
      %s395 = scalar_lea.vmem %s1, %s394
      %p396 = scmp.lt.s32.totalorder %s22, 1
      %s397 = scalar_select %p396, %s22, 1
      %s398 = smul.addr %s397, 3
      %s399 = smul.addr %s398, 4
      %s400 = scalar_lea.vmem %s6, %s399
      %p401 = scmp.lt.s32.totalorder %s22, 1
      %s402 = scalar_select %p401, %s22, 1
      %s403 = scalar_lea.vmem %s7, %s402
      %p404 = scmp.lt.s32.totalorder %s22, 1
      %s405 = scalar_select %p404, %s22, 1
      %s406 = smul.addr %s405, 4
      %s407 = scalar_lea.vmem %s8, %s406
      %p408 = scmp.lt.s32.totalorder %s22, 1
      %s409 = scalar_select %p408, %s22, 1
      %s410 = smul.addr %s409, 4
      %s411 = scalar_lea.vmem %s9, %s410
      %p412 = scmp.lt.s32.totalorder %s22, 1
      %s413 = scalar_select %p412, %s22, 1
      %s414 = smul.addr %s413, 4
      %s415 = scalar_lea.vmem %s10, %s414
      %v417 = vld [vmem:[%s391] sm:$0xff]
      %v418 = vld [vmem:[%s391 + $0x8] sm:$0xf]
      %v420 = vcombine.high %v417, %v417
      %422 = vrot.lane.b32.xlu0 %v417, 19
      %v423 = vpop.permute.xlu0 %422
      %424 = vrot.lane.b32.xlu0 %v420, 19
      %v425 = vpop.permute.xlu0 %424
      %426 = vrot.lane.b32.xlu0 %v418, 19
      %v427 = vpop.permute.xlu0 %426
      %v428 = vlaneseq
      %v429 = vand.u32 %v428, 127
      %vm430 = vcmp.lt.s32.totalorder %v429, 19
      %v431 = vsel %vm430, %v425, %v427
      %v432 = vsel %vm430, %v423, %v425
      %v433 = vsel %vm430, %v427, %v423
      %v434 = vld [vmem:[%s2] sm:$0xf]
      %v435 = vld [vmem:[%s2 + $0x4] sm:$0xf]
      %v436 = vld [vmem:[%s2 + $0x8] sm:$0xf]
      %v437 = vld [vmem:[%s2 + $0xc] sm:$0xf]
      %v438 = vpack.c.bf16 %v433, %v433
      %v439 = vpack.c.bf16 %v432, %v432
      %v440 = vpack.c.bf16 %v431, %v431
      %441 = vrot.lane.b32.xlu0 %v417, 18
      %v442 = vpop.permute.xlu0 %441
      %443 = vrot.lane.b32.xlu0 %v420, 18
      %v444 = vpop.permute.xlu0 %443
      %445 = vrot.lane.b32.xlu0 %v418, 18
      %v446 = vpop.permute.xlu0 %445
      %vm447 = vcmp.lt.s32.totalorder %v429, 18
      %v448 = vsel %vm447, %v444, %v446
      %v449 = vsel %vm447, %v442, %v444
      %v450 = vsel %vm447, %v446, %v442
      %s451 = scalar_lea.vmem %s2, 16
      %v452 = vld [vmem:[%s451] sm:$0xf]
      %v453 = vld [vmem:[%s451 + $0x4] sm:$0xf]
      %v454 = vld [vmem:[%s451 + $0x8] sm:$0xf]
      %v455 = vld [vmem:[%s451 + $0xc] sm:$0xf]
      %v456 = vpack.c.bf16 %v450, %v450
      %v457 = vpack.c.bf16 %v449, %v449
      %v458 = vpack.c.bf16 %v448, %v448
      %v463 = vunpack.c.l.b16 %v452
      %v464 = vunpack.c.l.b16 %v453
      %v465 = vunpack.c.l.b16 %v454
      %v466 = vunpack.c.l.b16 %v455
      %v467 = vpack.c.b16 %v464, %v463
      %v468 = vpack.c.b16 %v466, %v465
      %vm469 = vcmask 31744
      %v471 = vsel %vm469, %v467, 0
      %v474 = vsel %vm469, %v468, 0
      %vm476 = vcmask 1041408
      %v478 = vsel %vm476, %v456, 0
      %v481 = vsel %vm476, %v457, 0
      %v484 = vsel %vm476, %v458, 0
      %486 = vmatprep.subr.bf16.mxu0 %v481
      %487 = vmatpush1.bf16.msra.mxu0 %v478
      %488 = vmatprep.subr.bf16.mxu0 0
      %489 = vmatpush1.bf16.msra.mxu0 0
      %490 = vmatprep.subr.bf16.mxu0 0
      %491 = vmatpush1.bf16.msra.mxu0 0
      %492 = vmatprep.subr.bf16.mxu0 0
      %493 = vmatpush1.bf16.msra.mxu0 0
      %494 = vmatprep.subr.bf16.mxu0 0
      %495 = vmatpush1.bf16.msra.mxu0 0
      %496 = vmatprep.subr.bf16.mxu0 0
      %497 = vmatpush1.bf16.msra.mxu0 0
      %498 = vmatprep.subr.bf16.mxu0 0
      %499 = vmatpush1.bf16.msra.mxu0 0
      %500 = vmatprep.subr.bf16.mxu0 0
      %501 = vmatpush1.bf16.msra.mxu0 0
      %502 = vmatprep.subr.bf16.mxu0 0
      %503 = vmatpush1.bf16.msra.mxu0 0
      %504 = vmatprep.subr.bf16.mxu0 0
      %505 = vmatpush1.bf16.msra.mxu0 0
      %506 = vmatprep.subr.bf16.mxu0 0
      %507 = vmatpush1.bf16.msra.mxu0 0
      %508 = vmatprep.subr.bf16.mxu0 0
      %509 = vmatpush1.bf16.msra.mxu0 0
      %510 = vmatprep.subr.bf16.mxu0 0
      %511 = vmatpush1.bf16.msra.mxu0 0
      %512 = vmatprep.subr.bf16.mxu0 0
      %513 = vmatpush1.bf16.msra.mxu0 0
      %514 = vmatprep.subr.bf16.mxu0 0
      %515 = vmatpush1.bf16.msra.mxu0 0
      %516 = vmatprep.subr.bf16.mxu0 0
      %517 = vmatpush1.bf16.msra.mxu0 0
      %518 = vmatprep.mubr.bf16.mxu0 0
      %519 = vmatmul.mubr.bf16.gmra.mrb[0].mxu0 %v471
      %v520 = vpop.f32.mrb[0].mxu0
      %v521 = vadd.f32 0.0, %v520
      %v522 = vpop.f32.mrb[0].mxu0
      %v523 = vadd.f32 0.0, %v522
      %v524 = vpop.f32.mrb[0].mxu0
      %v525 = vadd.f32 0.0, %v524
      %v526 = vpop.f32.mrb[0].mxu0
      %v527 = vadd.f32 0.0, %v526
      %528 = vmatprep.mubr.bf16.mxu0 0
      %529 = vmatmul.mubr.bf16.gmra.mrb[0].mxu0 %v474
      %v530 = vpop.f32.mrb[0].mxu0
      %v531 = vadd.f32 0.0, %v530
      %v532 = vpop.f32.mrb[0].mxu0
      %v533 = vadd.f32 0.0, %v532
      %v534 = vpop.f32.mrb[0].mxu0
      %v535 = vadd.f32 0.0, %v534
      %v536 = vpop.f32.mrb[0].mxu0
      %v537 = vadd.f32 0.0, %v536
      %538 = vdwg.mxu0
      %539 = vmatprep.subr.bf16.mxu0 0
      %540 = vmatpush1.bf16.msra.mxu0 %v484
      %541 = vmatprep.subr.bf16.mxu0 0
      %542 = vmatpush1.bf16.msra.mxu0 0
      %543 = vmatprep.subr.bf16.mxu0 0
      %544 = vmatpush1.bf16.msra.mxu0 0
      %545 = vmatprep.subr.bf16.mxu0 0
      %546 = vmatpush1.bf16.msra.mxu0 0
      %547 = vmatprep.subr.bf16.mxu0 0
      %548 = vmatpush1.bf16.msra.mxu0 0
      %549 = vmatprep.subr.bf16.mxu0 0
      %550 = vmatpush1.bf16.msra.mxu0 0
      %551 = vmatprep.subr.bf16.mxu0 0
      %552 = vmatpush1.bf16.msra.mxu0 0
      %553 = vmatprep.subr.bf16.mxu0 0
      %554 = vmatpush1.bf16.msra.mxu0 0
      %555 = vmatprep.subr.bf16.mxu0 0
      %556 = vmatpush1.bf16.msra.mxu0 0
      %557 = vmatprep.subr.bf16.mxu0 0
      %558 = vmatpush1.bf16.msra.mxu0 0
      %559 = vmatprep.subr.bf16.mxu0 0
      %560 = vmatpush1.bf16.msra.mxu0 0
      %561 = vmatprep.subr.bf16.mxu0 0
      %562 = vmatpush1.bf16.msra.mxu0 0
      %563 = vmatprep.subr.bf16.mxu0 0
      %564 = vmatpush1.bf16.msra.mxu0 0
      %565 = vmatprep.subr.bf16.mxu0 0
      %566 = vmatpush1.bf16.msra.mxu0 0
      %567 = vmatprep.subr.bf16.mxu0 0
      %568 = vmatpush1.bf16.msra.mxu0 0
      %569 = vmatprep.subr.bf16.mxu0 0
      %570 = vmatpush1.bf16.msra.mxu0 0
      %571 = vmatprep.mubr.bf16.mxu0 0
      %572 = vmatmul.mubr.bf16.gmra.mrb[0].mxu0 %v471
      %v573 = vpop.f32.mrb[0].mxu0
      %v574 = vadd.f32 0.0, %v573
      %v575 = vpop.f32.mrb[0].mxu0
      %v576 = vpop.f32.mrb[0].mxu0
      %v577 = vadd.f32 0.0, %v576
      %v578 = vpop.f32.mrb[0].mxu0
      %579 = vmatprep.mubr.bf16.mxu0 0
      %580 = vmatmul.mubr.bf16.gmra.mrb[0].mxu0 %v474
      %v581 = vpop.f32.mrb[0].mxu0
      %v582 = vadd.f32 0.0, %v581
      %v583 = vpop.f32.mrb[0].mxu0
      %v584 = vpop.f32.mrb[0].mxu0
      %v585 = vadd.f32 0.0, %v584
      %v586 = vpop.f32.mrb[0].mxu0
      %587 = vdwg.mxu0
      %v592 = vunpack.c.l.b16 %v434
      %v593 = vunpack.c.l.b16 %v435
      %v594 = vunpack.c.l.b16 %v436
      %v595 = vunpack.c.l.b16 %v437
      %v596 = vpack.c.b16 %v593, %v592
      %v597 = vpack.c.b16 %v595, %v594
      %v599 = vsel %vm469, %v596, 0
      %v602 = vsel %vm469, %v597, 0
      %v605 = vsel %vm476, %v438, 0
      %v608 = vsel %vm476, %v439, 0
      %v611 = vsel %vm476, %v440, 0
      %613 = vmatprep.subr.bf16.mxu0 %v608
      %614 = vmatpush1.bf16.msra.mxu0 %v605
      %615 = vmatprep.subr.bf16.mxu0 0
      %616 = vmatpush1.bf16.msra.mxu0 0
      %617 = vmatprep.subr.bf16.mxu0 0
      %618 = vmatpush1.bf16.msra.mxu0 0
      %619 = vmatprep.subr.bf16.mxu0 0
      %620 = vmatpush1.bf16.msra.mxu0 0
      %621 = vmatprep.subr.bf16.mxu0 0
      %622 = vmatpush1.bf16.msra.mxu0 0
      %623 = vmatprep.subr.bf16.mxu0 0
      %624 = vmatpush1.bf16.msra.mxu0 0
      %625 = vmatprep.subr.bf16.mxu0 0
      %626 = vmatpush1.bf16.msra.mxu0 0
      %627 = vmatprep.subr.bf16.mxu0 0
      %628 = vmatpush1.bf16.msra.mxu0 0
      %629 = vmatprep.subr.bf16.mxu0 0
      %630 = vmatpush1.bf16.msra.mxu0 0
      %631 = vmatprep.subr.bf16.mxu0 0
      %632 = vmatpush1.bf16.msra.mxu0 0
      %633 = vmatprep.subr.bf16.mxu0 0
      %634 = vmatpush1.bf16.msra.mxu0 0
      %635 = vmatprep.subr.bf16.mxu0 0
      %636 = vmatpush1.bf16.msra.mxu0 0
      %637 = vmatprep.subr.bf16.mxu0 0
      %638 = vmatpush1.bf16.msra.mxu0 0
      %639 = vmatprep.subr.bf16.mxu0 0
      %640 = vmatpush1.bf16.msra.mxu0 0
      %641 = vmatprep.subr.bf16.mxu0 0
      %642 = vmatpush1.bf16.msra.mxu0 0
      %643 = vmatprep.subr.bf16.mxu0 0
      %644 = vmatpush1.bf16.msra.mxu0 0
      %645 = vmatprep.mubr.bf16.mxu0 0
      %646 = vmatmul.mubr.bf16.gmra.mrb[0].mxu0 %v599
      %v647 = vpop.f32.mrb[0].mxu0
      %v648 = vadd.f32 %v521, %v647
      %v649 = vpop.f32.mrb[0].mxu0
      %v650 = vadd.f32 %v523, %v649
      %v651 = vpop.f32.mrb[0].mxu0
      %v652 = vadd.f32 %v525, %v651
      %v653 = vpop.f32.mrb[0].mxu0
      %v654 = vadd.f32 %v527, %v653
      %655 = vmatprep.mubr.bf16.mxu0 0
      %656 = vmatmul.mubr.bf16.gmra.mrb[0].mxu0 %v602
      %v657 = vpop.f32.mrb[0].mxu0
      %v658 = vadd.f32 %v531, %v657
      %v659 = vpop.f32.mrb[0].mxu0
      %v660 = vadd.f32 %v533, %v659
      %v661 = vpop.f32.mrb[0].mxu0
      %v662 = vadd.f32 %v535, %v661
      %v663 = vpop.f32.mrb[0].mxu0
      %v664 = vadd.f32 %v537, %v663
      %665 = vdwg.mxu0
      %666 = vmatprep.subr.bf16.mxu0 0
      %667 = vmatpush1.bf16.msra.mxu0 %v611
      %668 = vmatprep.subr.bf16.mxu0 0
      %669 = vmatpush1.bf16.msra.mxu0 0
      %670 = vmatprep.subr.bf16.mxu0 0
      %671 = vmatpush1.bf16.msra.mxu0 0
      %672 = vmatprep.subr.bf16.mxu0 0
      %673 = vmatpush1.bf16.msra.mxu0 0
      %674 = vmatprep.subr.bf16.mxu0 0
      %675 = vmatpush1.bf16.msra.mxu0 0
      %676 = vmatprep.subr.bf16.mxu0 0
      %677 = vmatpush1.bf16.msra.mxu0 0
      %678 = vmatprep.subr.bf16.mxu0 0
      %679 = vmatpush1.bf16.msra.mxu0 0
      %680 = vmatprep.subr.bf16.mxu0 0
      %681 = vmatpush1.bf16.msra.mxu0 0
      %682 = vmatprep.subr.bf16.mxu0 0
      %683 = vmatpush1.bf16.msra.mxu0 0
      %684 = vmatprep.subr.bf16.mxu0 0
      %685 = vmatpush1.bf16.msra.mxu0 0
      %686 = vmatprep.subr.bf16.mxu0 0
      %687 = vmatpush1.bf16.msra.mxu0 0
      %688 = vmatprep.subr.bf16.mxu0 0
      %689 = vmatpush1.bf16.msra.mxu0 0
      %690 = vmatprep.subr.bf16.mxu0 0
      %691 = vmatpush1.bf16.msra.mxu0 0
      %692 = vmatprep.subr.bf16.mxu0 0
      %693 = vmatpush1.bf16.msra.mxu0 0
      %694 = vmatprep.subr.bf16.mxu0 0
      %695 = vmatpush1.bf16.msra.mxu0 0
      %696 = vmatprep.subr.bf16.mxu0 0
      %697 = vmatpush1.bf16.msra.mxu0 0
      %698 = vmatprep.mubr.bf16.mxu0 0
      %699 = vmatmul.mubr.bf16.gmra.mrb[0].mxu0 %v599
      %v700 = vpop.f32.mrb[0].mxu0
      %v701 = vadd.f32 %v574, %v700
      %v702 = vpop.f32.mrb[0].mxu0
      %v703 = vpop.f32.mrb[0].mxu0
      %v704 = vadd.f32 %v577, %v703
      %v705 = vpop.f32.mrb[0].mxu0
      %706 = vmatprep.mubr.bf16.mxu0 0
      %707 = vmatmul.mubr.bf16.gmra.mrb[0].mxu0 %v602
      %v708 = vpop.f32.mrb[0].mxu0
      %v709 = vadd.f32 %v582, %v708
      %v710 = vpop.f32.mrb[0].mxu0
      %v711 = vpop.f32.mrb[0].mxu0
      %v712 = vadd.f32 %v585, %v711
      %v713 = vpop.f32.mrb[0].mxu0
      %714 = vdwg.mxu0
      %715 = vrot.lane.b32.xlu0 %v417, 17
      %v716 = vpop.permute.xlu0 %715
      %717 = vrot.lane.b32.xlu0 %v420, 17
      %v718 = vpop.permute.xlu0 %717
      %719 = vrot.lane.b32.xlu0 %v418, 17
      %v720 = vpop.permute.xlu0 %719
      %vm721 = vcmp.lt.s32.totalorder %v429, 17
      %v722 = vsel %vm721, %v718, %v720
      %v723 = vsel %vm721, %v716, %v718
      %v724 = vsel %vm721, %v720, %v716
      %s725 = scalar_lea.vmem %s2, 32
      %v726 = vld [vmem:[%s725] sm:$0xf]
      %v727 = vld [vmem:[%s725 + $0x4] sm:$0xf]
      %v728 = vld [vmem:[%s725 + $0x8] sm:$0xf]
      %v729 = vld [vmem:[%s725 + $0xc] sm:$0xf]
      %v730 = vpack.c.bf16 %v724, %v724
      %v731 = vpack.c.bf16 %v723, %v723
      %v732 = vpack.c.bf16 %v722, %v722
      %v737 = vunpack.c.l.b16 %v726
      %v738 = vunpack.c.l.b16 %v727
      %v739 = vunpack.c.l.b16 %v728
      %v740 = vunpack.c.l.b16 %v729
      %v741 = vpack.c.b16 %v738, %v737
      %v742 = vpack.c.b16 %v740, %v739
      %v744 = vsel %vm469, %v741, 0
      %v747 = vsel %vm469, %v742, 0
      %v750 = vsel %vm476, %v730, 0
      %v753 = vsel %vm476, %v731, 0
      %v756 = vsel %vm476, %v732, 0
      %758 = vmatprep.subr.bf16.mxu0 %v753
      %759 = vmatpush1.bf16.msra.mxu0 %v750
      %760 = vmatprep.subr.bf16.mxu0 0
      %761 = vmatpush1.bf16.msra.mxu0 0
      %762 = vmatprep.subr.bf16.mxu0 0
      %763 = vmatpush1.bf16.msra.mxu0 0
      %764 = vmatprep.subr.bf16.mxu0 0
      %765 = vmatpush1.bf16.msra.mxu0 0
      %766 = vmatprep.subr.bf16.mxu0 0
      %767 = vmatpush1.bf16.msra.mxu0 0
      %768 = vmatprep.subr.bf16.mxu0 0
      %769 = vmatpush1.bf16.msra.mxu0 0
      %770 = vmatprep.subr.bf16.mxu0 0
      %771 = vmatpush1.bf16.msra.mxu0 0
      %772 = vmatprep.subr.bf16.mxu0 0
      %773 = vmatpush1.bf16.msra.mxu0 0
      %774 = vmatprep.subr.bf16.mxu0 0
      %775 = vmatpush1.bf16.msra.mxu0 0
      %776 = vmatprep.subr.bf16.mxu0 0
      %777 = vmatpush1.bf16.msra.mxu0 0
      %778 = vmatprep.subr.bf16.mxu0 0
      %779 = vmatpush1.bf16.msra.mxu0 0
      %780 = vmatprep.subr.bf16.mxu0 0
      %781 = vmatpush1.bf16.msra.mxu0 0
      %782 = vmatprep.subr.bf16.mxu0 0
      %783 = vmatpush1.bf16.msra.mxu0 0
      %784 = vmatprep.subr.bf16.mxu0 0
      %785 = vmatpush1.bf16.msra.mxu0 0
      %786 = vmatprep.subr.bf16.mxu0 0
      %787 = vmatpush1.bf16.msra.mxu0 0
      %788 = vmatprep.subr.bf16.mxu0 0
      %789 = vmatpush1.bf16.msra.mxu0 0
      %790 = vmatprep.mubr.bf16.mxu0 0
      %791 = vmatmul.mubr.bf16.gmra.mrb[0].mxu0 %v744
      %v792 = vpop.f32.mrb[0].mxu0
      %v793 = vadd.f32 0.0, %v792
      %v794 = vpop.f32.mrb[0].mxu0
      %v795 = vadd.f32 0.0, %v794
      %v796 = vpop.f32.mrb[0].mxu0
      %v797 = vadd.f32 0.0, %v796
      %v798 = vpop.f32.mrb[0].mxu0
      %v799 = vadd.f32 0.0, %v798
      %800 = vmatprep.mubr.bf16.mxu0 0
      %801 = vmatmul.mubr.bf16.gmra.mrb[0].mxu0 %v747
      %v802 = vpop.f32.mrb[0].mxu0
      %v803 = vadd.f32 0.0, %v802
      %v804 = vpop.f32.mrb[0].mxu0
      %v805 = vadd.f32 0.0, %v804
      %v806 = vpop.f32.mrb[0].mxu0
      %v807 = vadd.f32 0.0, %v806
      %v808 = vpop.f32.mrb[0].mxu0
      %v809 = vadd.f32 0.0, %v808
      %810 = vdwg.mxu0
      %811 = vmatprep.subr.bf16.mxu0 0
      %812 = vmatpush1.bf16.msra.mxu0 %v756
      %813 = vmatprep.subr.bf16.mxu0 0
      %814 = vmatpush1.bf16.msra.mxu0 0
      %815 = vmatprep.subr.bf16.mxu0 0
      %816 = vmatpush1.bf16.msra.mxu0 0
      %817 = vmatprep.subr.bf16.mxu0 0
      %818 = vmatpush1.bf16.msra.mxu0 0
      %819 = vmatprep.subr.bf16.mxu0 0
      %820 = vmatpush1.bf16.msra.mxu0 0
      %821 = vmatprep.subr.bf16.mxu0 0
      %822 = vmatpush1.bf16.msra.mxu0 0
      %823 = vmatprep.subr.bf16.mxu0 0
      %824 = vmatpush1.bf16.msra.mxu0 0
      %825 = vmatprep.subr.bf16.mxu0 0
      %826 = vmatpush1.bf16.msra.mxu0 0
      %827 = vmatprep.subr.bf16.mxu0 0
      %828 = vmatpush1.bf16.msra.mxu0 0
      %829 = vmatprep.subr.bf16.mxu0 0
      %830 = vmatpush1.bf16.msra.mxu0 0
      %831 = vmatprep.subr.bf16.mxu0 0
      %832 = vmatpush1.bf16.msra.mxu0 0
      %833 = vmatprep.subr.bf16.mxu0 0
      %834 = vmatpush1.bf16.msra.mxu0 0
      %835 = vmatprep.subr.bf16.mxu0 0
      %836 = vmatpush1.bf16.msra.mxu0 0
      %837 = vmatprep.subr.bf16.mxu0 0
      %838 = vmatpush1.bf16.msra.mxu0 0
      %839 = vmatprep.subr.bf16.mxu0 0
      %840 = vmatpush1.bf16.msra.mxu0 0
      %841 = vmatprep.subr.bf16.mxu0 0
      %842 = vmatpush1.bf16.msra.mxu0 0
      %843 = vmatprep.mubr.bf16.mxu0 0
      %844 = vmatmul.mubr.bf16.gmra.mrb[0].mxu0 %v744
      %v845 = vpop.f32.mrb[0].mxu0
      %v846 = vadd.f32 0.0, %v845
      %v847 = vpop.f32.mrb[0].mxu0
      %v848 = vpop.f32.mrb[0].mxu0
      %v849 = vadd.f32 0.0, %v848
      %v850 = vpop.f32.mrb[0].mxu0
      %851 = vmatprep.mubr.bf16.mxu0 0
      %852 = vmatmul.mubr.bf16.gmra.mrb[0].mxu0 %v747
      %v853 = vpop.f32.mrb[0].mxu0
      %v854 = vadd.f32 0.0, %v853
      %v855 = vpop.f32.mrb[0].mxu0
      %v856 = vpop.f32.mrb[0].mxu0
      %v857 = vadd.f32 0.0, %v856
      %v858 = vpop.f32.mrb[0].mxu0
      %859 = vdwg.mxu0
      %v860 = vadd.f32 %v648, %v793
      %v861 = vadd.f32 %v650, %v795
      %v862 = vadd.f32 %v701, %v846
      %v863 = vadd.f32 %v652, %v797
      %v864 = vadd.f32 %v654, %v799
      %v865 = vadd.f32 %v704, %v849
      %v866 = vadd.f32 %v658, %v803
      %v867 = vadd.f32 %v660, %v805
      %v868 = vadd.f32 %v709, %v854
      %v869 = vadd.f32 %v662, %v807
      %v870 = vadd.f32 %v664, %v809
      %v871 = vadd.f32 %v712, %v857
      %872 = vrot.lane.b32.xlu0 %v417, 1
      %v873 = vpop.permute.xlu0 %872
      %874 = vrot.lane.b32.xlu0 %v420, 1
      %v875 = vpop.permute.xlu0 %874
      %876 = vrot.lane.b32.xlu0 %v418, 1
      %v877 = vpop.permute.xlu0 %876
      %vm878 = vcmp.lt.s32.totalorder %v429, 1
      %v879 = vsel %vm878, %v875, %v877
      %v880 = vsel %vm878, %v873, %v875
      %v881 = vsel %vm878, %v877, %v873
      %s882 = scalar_lea.vmem %s2, 48
      %v883 = vld [vmem:[%s882] sm:$0xf]
      %v884 = vld [vmem:[%s882 + $0x4] sm:$0xf]
      %v885 = vld [vmem:[%s882 + $0x8] sm:$0xf]
      %v886 = vld [vmem:[%s882 + $0xc] sm:$0xf]
      %v887 = vpack.c.bf16 %v881, %v881
      %v888 = vpack.c.bf16 %v880, %v880
      %v889 = vpack.c.bf16 %v879, %v879
      %v894 = vunpack.c.l.b16 %v883
      %v895 = vunpack.c.l.b16 %v884
      %v896 = vunpack.c.l.b16 %v885
      %v897 = vunpack.c.l.b16 %v886
      %v898 = vpack.c.b16 %v895, %v894
      %v899 = vpack.c.b16 %v897, %v896
      %v901 = vsel %vm469, %v898, 0
      %v904 = vsel %vm469, %v899, 0
      %v907 = vsel %vm476, %v887, 0
      %v910 = vsel %vm476, %v888, 0
      %v913 = vsel %vm476, %v889, 0
      %915 = vmatprep.subr.bf16.mxu0 %v910
      %916 = vmatpush1.bf16.msra.mxu0 %v907
      %917 = vmatprep.subr.bf16.mxu0 0
      %918 = vmatpush1.bf16.msra.mxu0 0
      %919 = vmatprep.subr.bf16.mxu0 0
      %920 = vmatpush1.bf16.msra.mxu0 0
      %921 = vmatprep.subr.bf16.mxu0 0
      %922 = vmatpush1.bf16.msra.mxu0 0
      %923 = vmatprep.subr.bf16.mxu0 0
      %924 = vmatpush1.bf16.msra.mxu0 0
      %925 = vmatprep.subr.bf16.mxu0 0
      %926 = vmatpush1.bf16.msra.mxu0 0
      %927 = vmatprep.subr.bf16.mxu0 0
      %928 = vmatpush1.bf16.msra.mxu0 0
      %929 = vmatprep.subr.bf16.mxu0 0
      %930 = vmatpush1.bf16.msra.mxu0 0
      %931 = vmatprep.subr.bf16.mxu0 0
      %932 = vmatpush1.bf16.msra.mxu0 0
      %933 = vmatprep.subr.bf16.mxu0 0
      %934 = vmatpush1.bf16.msra.mxu0 0
      %935 = vmatprep.subr.bf16.mxu0 0
      %936 = vmatpush1.bf16.msra.mxu0 0
      %937 = vmatprep.subr.bf16.mxu0 0
      %938 = vmatpush1.bf16.msra.mxu0 0
      %939 = vmatprep.subr.bf16.mxu0 0
      %940 = vmatpush1.bf16.msra.mxu0 0
      %941 = vmatprep.subr.bf16.mxu0 0
      %942 = vmatpush1.bf16.msra.mxu0 0
      %943 = vmatprep.subr.bf16.mxu0 0
      %944 = vmatpush1.bf16.msra.mxu0 0
      %945 = vmatprep.subr.bf16.mxu0 0
      %946 = vmatpush1.bf16.msra.mxu0 0
      %947 = vmatprep.mubr.bf16.mxu0 0
      %948 = vmatmul.mubr.bf16.gmra.mrb[0].mxu0 %v901
      %v949 = vpop.f32.mrb[0].mxu0
      %v950 = vadd.f32 0.0, %v949
      %v951 = vpop.f32.mrb[0].mxu0
      %v952 = vadd.f32 0.0, %v951
      %v953 = vpop.f32.mrb[0].mxu0
      %v954 = vadd.f32 0.0, %v953
      %v955 = vpop.f32.mrb[0].mxu0
      %v956 = vadd.f32 0.0, %v955
      %957 = vmatprep.mubr.bf16.mxu0 0
      %958 = vmatmul.mubr.bf16.gmra.mrb[0].mxu0 %v904
      %v959 = vpop.f32.mrb[0].mxu0
      %v960 = vadd.f32 0.0, %v959
      %v961 = vpop.f32.mrb[0].mxu0
      %v962 = vadd.f32 0.0, %v961
      %v963 = vpop.f32.mrb[0].mxu0
      %v964 = vadd.f32 0.0, %v963
      %v965 = vpop.f32.mrb[0].mxu0
      %v966 = vadd.f32 0.0, %v965
      %967 = vdwg.mxu0
      %968 = vmatprep.subr.bf16.mxu0 0
      %969 = vmatpush1.bf16.msra.mxu0 %v913
      %970 = vmatprep.subr.bf16.mxu0 0
      %971 = vmatpush1.bf16.msra.mxu0 0
      %972 = vmatprep.subr.bf16.mxu0 0
      %973 = vmatpush1.bf16.msra.mxu0 0
      %974 = vmatprep.subr.bf16.mxu0 0
      %975 = vmatpush1.bf16.msra.mxu0 0
      %976 = vmatprep.subr.bf16.mxu0 0
      %977 = vmatpush1.bf16.msra.mxu0 0
      %978 = vmatprep.subr.bf16.mxu0 0
      %979 = vmatpush1.bf16.msra.mxu0 0
      %980 = vmatprep.subr.bf16.mxu0 0
      %981 = vmatpush1.bf16.msra.mxu0 0
      %982 = vmatprep.subr.bf16.mxu0 0
      %983 = vmatpush1.bf16.msra.mxu0 0
      %984 = vmatprep.subr.bf16.mxu0 0
      %985 = vmatpush1.bf16.msra.mxu0 0
      %986 = vmatprep.subr.bf16.mxu0 0
      %987 = vmatpush1.bf16.msra.mxu0 0
      %988 = vmatprep.subr.bf16.mxu0 0
      %989 = vmatpush1.bf16.msra.mxu0 0
      %990 = vmatprep.subr.bf16.mxu0 0
      %991 = vmatpush1.bf16.msra.mxu0 0
      %992 = vmatprep.subr.bf16.mxu0 0
      %993 = vmatpush1.bf16.msra.mxu0 0
      %994 = vmatprep.subr.bf16.mxu0 0
      %995 = vmatpush1.bf16.msra.mxu0 0
      %996 = vmatprep.subr.bf16.mxu0 0
      %997 = vmatpush1.bf16.msra.mxu0 0
      %998 = vmatprep.subr.bf16.mxu0 0
      %999 = vmatpush1.bf16.msra.mxu0 0
      %1000 = vmatprep.mubr.bf16.mxu0 0
      %1001 = vmatmul.mubr.bf16.gmra.mrb[0].mxu0 %v901
      %v1002 = vpop.f32.mrb[0].mxu0
      %v1003 = vadd.f32 0.0, %v1002
      %v1004 = vpop.f32.mrb[0].mxu0
      %v1005 = vpop.f32.mrb[0].mxu0
      %v1006 = vadd.f32 0.0, %v1005
      %v1007 = vpop.f32.mrb[0].mxu0
      %1008 = vmatprep.mubr.bf16.mxu0 0
      %1009 = vmatmul.mubr.bf16.gmra.mrb[0].mxu0 %v904
      %v1010 = vpop.f32.mrb[0].mxu0
      %v1011 = vadd.f32 0.0, %v1010
      %v1012 = vpop.f32.mrb[0].mxu0
      %v1013 = vpop.f32.mrb[0].mxu0
      %v1014 = vadd.f32 0.0, %v1013
      %v1015 = vpop.f32.mrb[0].mxu0
      %1016 = vdwg.mxu0
      %v1017 = vadd.f32 %v860, %v950
      %v1018 = vadd.f32 %v861, %v952
      %v1019 = vadd.f32 %v862, %v1003
      %v1020 = vadd.f32 %v863, %v954
      %v1021 = vadd.f32 %v864, %v956
      %v1022 = vadd.f32 %v865, %v1006
      %v1023 = vadd.f32 %v866, %v960
      %v1024 = vadd.f32 %v867, %v962
      %v1025 = vadd.f32 %v868, %v1011
      %v1026 = vadd.f32 %v869, %v964
      %v1027 = vadd.f32 %v870, %v966
      %v1028 = vadd.f32 %v871, %v1014
      %s1029 = scalar_lea.vmem %s2, 64
      %v1030 = vld [vmem:[%s1029] sm:$0xf]
      %v1031 = vld [vmem:[%s1029 + $0x4] sm:$0xf]
      %v1032 = vld [vmem:[%s1029 + $0x8] sm:$0xf]
      %v1033 = vld [vmem:[%s1029 + $0xc] sm:$0xf]
      %v1034 = vpack.c.bf16 %v417, %v417
      %v1035 = vpack.c.bf16 %v420, %v420
      %v1036 = vpack.c.bf16 %v418, %v418
      %v1041 = vunpack.c.l.b16 %v1030
      %v1042 = vunpack.c.l.b16 %v1031
      %v1043 = vunpack.c.l.b16 %v1032
      %v1044 = vunpack.c.l.b16 %v1033
      %v1045 = vpack.c.b16 %v1042, %v1041
      %v1046 = vpack.c.b16 %v1044, %v1043
      %v1048 = vsel %vm469, %v1045, 0
      %v1051 = vsel %vm469, %v1046, 0
      %v1054 = vsel %vm476, %v1034, 0
      %v1057 = vsel %vm476, %v1035, 0
      %v1060 = vsel %vm476, %v1036, 0
      %1062 = vmatprep.subr.bf16.mxu0 %v1057
      %1063 = vmatpush1.bf16.msra.mxu0 %v1054
      %1064 = vmatprep.subr.bf16.mxu0 0
      %1065 = vmatpush1.bf16.msra.mxu0 0
      %1066 = vmatprep.subr.bf16.mxu0 0
      %1067 = vmatpush1.bf16.msra.mxu0 0
      %1068 = vmatprep.subr.bf16.mxu0 0
      %1069 = vmatpush1.bf16.msra.mxu0 0
      %1070 = vmatprep.subr.bf16.mxu0 0
      %1071 = vmatpush1.bf16.msra.mxu0 0
      %1072 = vmatprep.subr.bf16.mxu0 0
      %1073 = vmatpush1.bf16.msra.mxu0 0
      %1074 = vmatprep.subr.bf16.mxu0 0
      %1075 = vmatpush1.bf16.msra.mxu0 0
      %1076 = vmatprep.subr.bf16.mxu0 0
      %1077 = vmatpush1.bf16.msra.mxu0 0
      %1078 = vmatprep.subr.bf16.mxu0 0
      %1079 = vmatpush1.bf16.msra.mxu0 0
      %1080 = vmatprep.subr.bf16.mxu0 0
      %1081 = vmatpush1.bf16.msra.mxu0 0
      %1082 = vmatprep.subr.bf16.mxu0 0
      %1083 = vmatpush1.bf16.msra.mxu0 0
      %1084 = vmatprep.subr.bf16.mxu0 0
      %1085 = vmatpush1.bf16.msra.mxu0 0
      %1086 = vmatprep.subr.bf16.mxu0 0
      %1087 = vmatpush1.bf16.msra.mxu0 0
      %1088 = vmatprep.subr.bf16.mxu0 0
      %1089 = vmatpush1.bf16.msra.mxu0 0
      %1090 = vmatprep.subr.bf16.mxu0 0
      %1091 = vmatpush1.bf16.msra.mxu0 0
      %1092 = vmatprep.subr.bf16.mxu0 0
      %1093 = vmatpush1.bf16.msra.mxu0 0
      %1094 = vmatprep.mubr.bf16.mxu0 0
      %1095 = vmatmul.mubr.bf16.gmra.mrb[0].mxu0 %v1048
      %v1096 = vpop.f32.mrb[0].mxu0
      %v1097 = vadd.f32 0.0, %v1096
      %v1098 = vpop.f32.mrb[0].mxu0
      %v1099 = vadd.f32 0.0, %v1098
      %v1100 = vpop.f32.mrb[0].mxu0
      %v1101 = vadd.f32 0.0, %v1100
      %v1102 = vpop.f32.mrb[0].mxu0
      %v1103 = vadd.f32 0.0, %v1102
      %1104 = vmatprep.mubr.bf16.mxu0 0
      %1105 = vmatmul.mubr.bf16.gmra.mrb[0].mxu0 %v1051
      %v1106 = vpop.f32.mrb[0].mxu0
      %v1107 = vadd.f32 0.0, %v1106
      %v1108 = vpop.f32.mrb[0].mxu0
      %v1109 = vadd.f32 0.0, %v1108
      %v1110 = vpop.f32.mrb[0].mxu0
      %v1111 = vadd.f32 0.0, %v1110
      %v1112 = vpop.f32.mrb[0].mxu0
      %v1113 = vadd.f32 0.0, %v1112
      %1114 = vdwg.mxu0
      %1115 = vmatprep.subr.bf16.mxu0 0
      %1116 = vmatpush1.bf16.msra.mxu0 %v1060
      %1117 = vmatprep.subr.bf16.mxu0 0
      %1118 = vmatpush1.bf16.msra.mxu0 0
      %1119 = vmatprep.subr.bf16.mxu0 0
      %1120 = vmatpush1.bf16.msra.mxu0 0
      %1121 = vmatprep.subr.bf16.mxu0 0
      %1122 = vmatpush1.bf16.msra.mxu0 0
      %1123 = vmatprep.subr.bf16.mxu0 0
      %1124 = vmatpush1.bf16.msra.mxu0 0
      %1125 = vmatprep.subr.bf16.mxu0 0
      %1126 = vmatpush1.bf16.msra.mxu0 0
      %1127 = vmatprep.subr.bf16.mxu0 0
      %1128 = vmatpush1.bf16.msra.mxu0 0
      %1129 = vmatprep.subr.bf16.mxu0 0
      %1130 = vmatpush1.bf16.msra.mxu0 0
      %1131 = vmatprep.subr.bf16.mxu0 0
      %1132 = vmatpush1.bf16.msra.mxu0 0
      %1133 = vmatprep.subr.bf16.mxu0 0
      %1134 = vmatpush1.bf16.msra.mxu0 0
      %1135 = vmatprep.subr.bf16.mxu0 0
      %1136 = vmatpush1.bf16.msra.mxu0 0
      %1137 = vmatprep.subr.bf16.mxu0 0
      %1138 = vmatpush1.bf16.msra.mxu0 0
      %1139 = vmatprep.subr.bf16.mxu0 0
      %1140 = vmatpush1.bf16.msra.mxu0 0
      %1141 = vmatprep.subr.bf16.mxu0 0
      %1142 = vmatpush1.bf16.msra.mxu0 0
      %1143 = vmatprep.subr.bf16.mxu0 0
      %1144 = vmatpush1.bf16.msra.mxu0 0
      %1145 = vmatprep.subr.bf16.mxu0 0
      %1146 = vmatpush1.bf16.msra.mxu0 0
      %1147 = vmatprep.mubr.bf16.mxu0 0
      %1148 = vmatmul.mubr.bf16.gmra.mrb[0].mxu0 %v1048
      %v1149 = vpop.f32.mrb[0].mxu0
      %v1150 = vadd.f32 0.0, %v1149
      %v1151 = vpop.f32.mrb[0].mxu0
      %v1152 = vpop.f32.mrb[0].mxu0
      %v1153 = vadd.f32 0.0, %v1152
      %v1154 = vpop.f32.mrb[0].mxu0
      %1155 = vmatprep.mubr.bf16.mxu0 0
      %1156 = vmatmul.mubr.bf16.gmra.mrb[0].mxu0 %v1051
      %v1157 = vpop.f32.mrb[0].mxu0
      %v1158 = vadd.f32 0.0, %v1157
      %v1159 = vpop.f32.mrb[0].mxu0
      %v1160 = vpop.f32.mrb[0].mxu0
      %v1161 = vadd.f32 0.0, %v1160
      %v1162 = vpop.f32.mrb[0].mxu0
      %1163 = vdwg.mxu0
      %v1164 = vadd.f32 %v1017, %v1097
      %v1165 = vadd.f32 %v1018, %v1099
      %v1166 = vadd.f32 %v1019, %v1150
      %v1167 = vadd.f32 %v1020, %v1101
      %v1168 = vadd.f32 %v1021, %v1103
      %v1169 = vadd.f32 %v1022, %v1153
      %v1170 = vadd.f32 %v1023, %v1107
      %v1171 = vadd.f32 %v1024, %v1109
      %v1172 = vadd.f32 %v1025, %v1158
      %v1173 = vadd.f32 %v1026, %v1111
      %v1174 = vadd.f32 %v1027, %v1113
      %v1175 = vadd.f32 %v1028, %v1161
      %1176 = vrot.lane.b32.xlu0 %v417, 127
      %v1177 = vpop.permute.xlu0 %1176
      %1178 = vrot.lane.b32.xlu0 %v420, 127
      %v1179 = vpop.permute.xlu0 %1178
      %1180 = vrot.lane.b32.xlu0 %v418, 127
      %v1181 = vpop.permute.xlu0 %1180
      %vm1182 = vcmp.lt.s32.totalorder %v429, 127
      %v1183 = vsel %vm1182, %v1179, %v1181
      %v1184 = vsel %vm1182, %v1177, %v1179
      %v1185 = vsel %vm1182, %v1181, %v1177
      %s1186 = scalar_lea.vmem %s2, 80
      %v1187 = vld [vmem:[%s1186] sm:$0xf]
      %v1188 = vld [vmem:[%s1186 + $0x4] sm:$0xf]
      %v1189 = vld [vmem:[%s1186 + $0x8] sm:$0xf]
      %v1190 = vld [vmem:[%s1186 + $0xc] sm:$0xf]
      %v1191 = vpack.c.bf16 %v1184, %v1184
      %v1192 = vpack.c.bf16 %v1183, %v1183
      %v1193 = vpack.c.bf16 %v1185, %v1185
      %v1198 = vunpack.c.l.b16 %v1187
      %v1199 = vunpack.c.l.b16 %v1188
      %v1200 = vunpack.c.l.b16 %v1189
      %v1201 = vunpack.c.l.b16 %v1190
      %v1202 = vpack.c.b16 %v1199, %v1198
      %v1203 = vpack.c.b16 %v1201, %v1200
      %v1205 = vsel %vm469, %v1202, 0
      %v1208 = vsel %vm469, %v1203, 0
      %v1211 = vsel %vm476, %v1191, 0
      %v1214 = vsel %vm476, %v1192, 0
      %v1217 = vsel %vm476, %v1193, 0
      %1219 = vmatprep.subr.bf16.mxu0 %v1214
      %1220 = vmatpush1.bf16.msra.mxu0 %v1211
      %1221 = vmatprep.subr.bf16.mxu0 0
      %1222 = vmatpush1.bf16.msra.mxu0 0
      %1223 = vmatprep.subr.bf16.mxu0 0
      %1224 = vmatpush1.bf16.msra.mxu0 0
      %1225 = vmatprep.subr.bf16.mxu0 0
      %1226 = vmatpush1.bf16.msra.mxu0 0
      %1227 = vmatprep.subr.bf16.mxu0 0
      %1228 = vmatpush1.bf16.msra.mxu0 0
      %1229 = vmatprep.subr.bf16.mxu0 0
      %1230 = vmatpush1.bf16.msra.mxu0 0
      %1231 = vmatprep.subr.bf16.mxu0 0
      %1232 = vmatpush1.bf16.msra.mxu0 0
      %1233 = vmatprep.subr.bf16.mxu0 0
      %1234 = vmatpush1.bf16.msra.mxu0 0
      %1235 = vmatprep.subr.bf16.mxu0 0
      %1236 = vmatpush1.bf16.msra.mxu0 0
      %1237 = vmatprep.subr.bf16.mxu0 0
      %1238 = vmatpush1.bf16.msra.mxu0 0
      %1239 = vmatprep.subr.bf16.mxu0 0
      %1240 = vmatpush1.bf16.msra.mxu0 0
      %1241 = vmatprep.subr.bf16.mxu0 0
      %1242 = vmatpush1.bf16.msra.mxu0 0
      %1243 = vmatprep.subr.bf16.mxu0 0
      %1244 = vmatpush1.bf16.msra.mxu0 0
      %1245 = vmatprep.subr.bf16.mxu0 0
      %1246 = vmatpush1.bf16.msra.mxu0 0
      %1247 = vmatprep.subr.bf16.mxu0 0
      %1248 = vmatpush1.bf16.msra.mxu0 0
      %1249 = vmatprep.subr.bf16.mxu0 0
      %1250 = vmatpush1.bf16.msra.mxu0 0
      %1251 = vmatprep.mubr.bf16.mxu0 0
      %1252 = vmatmul.mubr.bf16.gmra.mrb[0].mxu0 %v1205
      %v1253 = vpop.f32.mrb[0].mxu0
      %v1254 = vadd.f32 0.0, %v1253
      %v1255 = vpop.f32.mrb[0].mxu0
      %v1256 = vadd.f32 0.0, %v1255
      %v1257 = vpop.f32.mrb[0].mxu0
      %v1258 = vadd.f32 0.0, %v1257
      %v1259 = vpop.f32.mrb[0].mxu0
      %v1260 = vadd.f32 0.0, %v1259
      %1261 = vmatprep.mubr.bf16.mxu0 0
      %1262 = vmatmul.mubr.bf16.gmra.mrb[0].mxu0 %v1208
      %v1263 = vpop.f32.mrb[0].mxu0
      %v1264 = vadd.f32 0.0, %v1263
      %v1265 = vpop.f32.mrb[0].mxu0
      %v1266 = vadd.f32 0.0, %v1265
      %v1267 = vpop.f32.mrb[0].mxu0
      %v1268 = vadd.f32 0.0, %v1267
      %v1269 = vpop.f32.mrb[0].mxu0
      %v1270 = vadd.f32 0.0, %v1269
      %1271 = vdwg.mxu0
      %1272 = vmatprep.subr.bf16.mxu0 0
      %1273 = vmatpush1.bf16.msra.mxu0 %v1217
      %1274 = vmatprep.subr.bf16.mxu0 0
      %1275 = vmatpush1.bf16.msra.mxu0 0
      %1276 = vmatprep.subr.bf16.mxu0 0
      %1277 = vmatpush1.bf16.msra.mxu0 0
      %1278 = vmatprep.subr.bf16.mxu0 0
      %1279 = vmatpush1.bf16.msra.mxu0 0
      %1280 = vmatprep.subr.bf16.mxu0 0
      %1281 = vmatpush1.bf16.msra.mxu0 0
      %1282 = vmatprep.subr.bf16.mxu0 0
      %1283 = vmatpush1.bf16.msra.mxu0 0
      %1284 = vmatprep.subr.bf16.mxu0 0
      %1285 = vmatpush1.bf16.msra.mxu0 0
      %1286 = vmatprep.subr.bf16.mxu0 0
      %1287 = vmatpush1.bf16.msra.mxu0 0
      %1288 = vmatprep.subr.bf16.mxu0 0
      %1289 = vmatpush1.bf16.msra.mxu0 0
      %1290 = vmatprep.subr.bf16.mxu0 0
      %1291 = vmatpush1.bf16.msra.mxu0 0
      %1292 = vmatprep.subr.bf16.mxu0 0
      %1293 = vmatpush1.bf16.msra.mxu0 0
      %1294 = vmatprep.subr.bf16.mxu0 0
      %1295 = vmatpush1.bf16.msra.mxu0 0
      %1296 = vmatprep.subr.bf16.mxu0 0
      %1297 = vmatpush1.bf16.msra.mxu0 0
      %1298 = vmatprep.subr.bf16.mxu0 0
      %1299 = vmatpush1.bf16.msra.mxu0 0
      %1300 = vmatprep.subr.bf16.mxu0 0
      %1301 = vmatpush1.bf16.msra.mxu0 0
      %1302 = vmatprep.subr.bf16.mxu0 0
      %1303 = vmatpush1.bf16.msra.mxu0 0
      %1304 = vmatprep.mubr.bf16.mxu0 0
      %1305 = vmatmul.mubr.bf16.gmra.mrb[0].mxu0 %v1205
      %v1306 = vpop.f32.mrb[0].mxu0
      %v1307 = vadd.f32 0.0, %v1306
      %v1308 = vpop.f32.mrb[0].mxu0
      %v1309 = vpop.f32.mrb[0].mxu0
      %v1310 = vadd.f32 0.0, %v1309
      %v1311 = vpop.f32.mrb[0].mxu0
      %1312 = vmatprep.mubr.bf16.mxu0 0
      %1313 = vmatmul.mubr.bf16.gmra.mrb[0].mxu0 %v1208
      %v1314 = vpop.f32.mrb[0].mxu0
      %v1315 = vadd.f32 0.0, %v1314
      %v1316 = vpop.f32.mrb[0].mxu0
      %v1317 = vpop.f32.mrb[0].mxu0
      %v1318 = vadd.f32 0.0, %v1317
      %v1319 = vpop.f32.mrb[0].mxu0
      %1320 = vdwg.mxu0
      %v1321 = vadd.f32 %v1164, %v1254
      %v1322 = vadd.f32 %v1165, %v1256
      %v1323 = vadd.f32 %v1166, %v1307
      %v1324 = vadd.f32 %v1167, %v1258
      %v1325 = vadd.f32 %v1168, %v1260
      %v1326 = vadd.f32 %v1169, %v1310
      %v1327 = vadd.f32 %v1170, %v1264
      %v1328 = vadd.f32 %v1171, %v1266
      %v1329 = vadd.f32 %v1172, %v1315
      %v1330 = vadd.f32 %v1173, %v1268
      %v1331 = vadd.f32 %v1174, %v1270
      %v1332 = vadd.f32 %v1175, %v1318
      %1333 = vrot.lane.b32.xlu0 %v417, 111
      %v1334 = vpop.permute.xlu0 %1333
      %1335 = vrot.lane.b32.xlu0 %v420, 111
      %v1336 = vpop.permute.xlu0 %1335
      %1337 = vrot.lane.b32.xlu0 %v418, 111
      %v1338 = vpop.permute.xlu0 %1337
      %vm1339 = vcmp.lt.s32.totalorder %v429, 111
      %v1340 = vsel %vm1339, %v1336, %v1338
      %v1341 = vsel %vm1339, %v1334, %v1336
      %v1342 = vsel %vm1339, %v1338, %v1334
      %s1343 = scalar_lea.vmem %s2, 96
      %v1344 = vld [vmem:[%s1343] sm:$0xf]
      %v1345 = vld [vmem:[%s1343 + $0x4] sm:$0xf]
      %v1346 = vld [vmem:[%s1343 + $0x8] sm:$0xf]
      %v1347 = vld [vmem:[%s1343 + $0xc] sm:$0xf]
      %v1348 = vpack.c.bf16 %v1341, %v1341
      %v1349 = vpack.c.bf16 %v1340, %v1340
      %v1350 = vpack.c.bf16 %v1342, %v1342
      %v1355 = vunpack.c.l.b16 %v1344
      %v1356 = vunpack.c.l.b16 %v1345
      %v1357 = vunpack.c.l.b16 %v1346
      %v1358 = vunpack.c.l.b16 %v1347
      %v1359 = vpack.c.b16 %v1356, %v1355
      %v1360 = vpack.c.b16 %v1358, %v1357
      %v1362 = vsel %vm469, %v1359, 0
      %v1365 = vsel %vm469, %v1360, 0
      %v1368 = vsel %vm476, %v1348, 0
      %v1371 = vsel %vm476, %v1349, 0
      %v1374 = vsel %vm476, %v1350, 0
      %1376 = vmatprep.subr.bf16.mxu0 %v1371
      %1377 = vmatpush1.bf16.msra.mxu0 %v1368
      %1378 = vmatprep.subr.bf16.mxu0 0
      %1379 = vmatpush1.bf16.msra.mxu0 0
      %1380 = vmatprep.subr.bf16.mxu0 0
      %1381 = vmatpush1.bf16.msra.mxu0 0
      %1382 = vmatprep.subr.bf16.mxu0 0
      %1383 = vmatpush1.bf16.msra.mxu0 0
      %1384 = vmatprep.subr.bf16.mxu0 0
      %1385 = vmatpush1.bf16.msra.mxu0 0
      %1386 = vmatprep.subr.bf16.mxu0 0
      %1387 = vmatpush1.bf16.msra.mxu0 0
      %1388 = vmatprep.subr.bf16.mxu0 0
      %1389 = vmatpush1.bf16.msra.mxu0 0
      %1390 = vmatprep.subr.bf16.mxu0 0
      %1391 = vmatpush1.bf16.msra.mxu0 0
      %1392 = vmatprep.subr.bf16.mxu0 0
      %1393 = vmatpush1.bf16.msra.mxu0 0
      %1394 = vmatprep.subr.bf16.mxu0 0
      %1395 = vmatpush1.bf16.msra.mxu0 0
      %1396 = vmatprep.subr.bf16.mxu0 0
      %1397 = vmatpush1.bf16.msra.mxu0 0
      %1398 = vmatprep.subr.bf16.mxu0 0
      %1399 = vmatpush1.bf16.msra.mxu0 0
      %1400 = vmatprep.subr.bf16.mxu0 0
      %1401 = vmatpush1.bf16.msra.mxu0 0
      %1402 = vmatprep.subr.bf16.mxu0 0
      %1403 = vmatpush1.bf16.msra.mxu0 0
      %1404 = vmatprep.subr.bf16.mxu0 0
      %1405 = vmatpush1.bf16.msra.mxu0 0
      %1406 = vmatprep.subr.bf16.mxu0 0
      %1407 = vmatpush1.bf16.msra.mxu0 0
      %1408 = vmatprep.mubr.bf16.mxu0 0
      %1409 = vmatmul.mubr.bf16.gmra.mrb[0].mxu0 %v1362
      %v1410 = vpop.f32.mrb[0].mxu0
      %v1411 = vadd.f32 0.0, %v1410
      %v1412 = vpop.f32.mrb[0].mxu0
      %v1413 = vadd.f32 0.0, %v1412
      %v1414 = vpop.f32.mrb[0].mxu0
      %v1415 = vadd.f32 0.0, %v1414
      %v1416 = vpop.f32.mrb[0].mxu0
      %v1417 = vadd.f32 0.0, %v1416
      %1418 = vmatprep.mubr.bf16.mxu0 0
      %1419 = vmatmul.mubr.bf16.gmra.mrb[0].mxu0 %v1365
      %v1420 = vpop.f32.mrb[0].mxu0
      %v1421 = vadd.f32 0.0, %v1420
      %v1422 = vpop.f32.mrb[0].mxu0
      %v1423 = vadd.f32 0.0, %v1422
      %v1424 = vpop.f32.mrb[0].mxu0
      %v1425 = vadd.f32 0.0, %v1424
      %v1426 = vpop.f32.mrb[0].mxu0
      %v1427 = vadd.f32 0.0, %v1426
      %1428 = vdwg.mxu0
      %1429 = vmatprep.subr.bf16.mxu0 0
      %1430 = vmatpush1.bf16.msra.mxu0 %v1374
      %1431 = vmatprep.subr.bf16.mxu0 0
      %1432 = vmatpush1.bf16.msra.mxu0 0
      %1433 = vmatprep.subr.bf16.mxu0 0
      %1434 = vmatpush1.bf16.msra.mxu0 0
      %1435 = vmatprep.subr.bf16.mxu0 0
      %1436 = vmatpush1.bf16.msra.mxu0 0
      %1437 = vmatprep.subr.bf16.mxu0 0
      %1438 = vmatpush1.bf16.msra.mxu0 0
      %1439 = vmatprep.subr.bf16.mxu0 0
      %1440 = vmatpush1.bf16.msra.mxu0 0
      %1441 = vmatprep.subr.bf16.mxu0 0
      %1442 = vmatpush1.bf16.msra.mxu0 0
      %1443 = vmatprep.subr.bf16.mxu0 0
      %1444 = vmatpush1.bf16.msra.mxu0 0
      %1445 = vmatprep.subr.bf16.mxu0 0
      %1446 = vmatpush1.bf16.msra.mxu0 0
      %1447 = vmatprep.subr.bf16.mxu0 0
      %1448 = vmatpush1.bf16.msra.mxu0 0
      %1449 = vmatprep.subr.bf16.mxu0 0
      %1450 = vmatpush1.bf16.msra.mxu0 0
      %1451 = vmatprep.subr.bf16.mxu0 0
      %1452 = vmatpush1.bf16.msra.mxu0 0
      %1453 = vmatprep.subr.bf16.mxu0 0
      %1454 = vmatpush1.bf16.msra.mxu0 0
      %1455 = vmatprep.subr.bf16.mxu0 0
      %1456 = vmatpush1.bf16.msra.mxu0 0
      %1457 = vmatprep.subr.bf16.mxu0 0
      %1458 = vmatpush1.bf16.msra.mxu0 0
      %1459 = vmatprep.subr.bf16.mxu0 0
      %1460 = vmatpush1.bf16.msra.mxu0 0
      %1461 = vmatprep.mubr.bf16.mxu0 0
      %1462 = vmatmul.mubr.bf16.gmra.mrb[0].mxu0 %v1362
      %v1463 = vpop.f32.mrb[0].mxu0
      %v1464 = vadd.f32 0.0, %v1463
      %v1465 = vpop.f32.mrb[0].mxu0
      %v1466 = vpop.f32.mrb[0].mxu0
      %v1467 = vadd.f32 0.0, %v1466
      %v1468 = vpop.f32.mrb[0].mxu0
      %1469 = vmatprep.mubr.bf16.mxu0 0
      %1470 = vmatmul.mubr.bf16.gmra.mrb[0].mxu0 %v1365
      %v1471 = vpop.f32.mrb[0].mxu0
      %v1472 = vadd.f32 0.0, %v1471
      %v1473 = vpop.f32.mrb[0].mxu0
      %v1474 = vpop.f32.mrb[0].mxu0
      %v1475 = vadd.f32 0.0, %v1474
      %v1476 = vpop.f32.mrb[0].mxu0
      %1477 = vdwg.mxu0
      %v1478 = vadd.f32 %v1321, %v1411
      %v1479 = vadd.f32 %v1322, %v1413
      %v1480 = vadd.f32 %v1323, %v1464
      %v1481 = vadd.f32 %v1324, %v1415
      %v1482 = vadd.f32 %v1325, %v1417
      %v1483 = vadd.f32 %v1326, %v1467
      %v1484 = vadd.f32 %v1327, %v1421
      %v1485 = vadd.f32 %v1328, %v1423
      %v1486 = vadd.f32 %v1329, %v1472
      %v1487 = vadd.f32 %v1330, %v1425
      %v1488 = vadd.f32 %v1331, %v1427
      %v1489 = vadd.f32 %v1332, %v1475
      %1490 = vrot.lane.b32.xlu0 %v417, 110
      %v1491 = vpop.permute.xlu0 %1490
      %1492 = vrot.lane.b32.xlu0 %v420, 110
      %v1493 = vpop.permute.xlu0 %1492
      %1494 = vrot.lane.b32.xlu0 %v418, 110
      %v1495 = vpop.permute.xlu0 %1494
      %vm1496 = vcmp.lt.s32.totalorder %v429, 110
      %v1497 = vsel %vm1496, %v1493, %v1495
      %v1498 = vsel %vm1496, %v1491, %v1493
      %v1499 = vsel %vm1496, %v1495, %v1491
      %s1500 = scalar_lea.vmem %s2, 112
      %v1501 = vld [vmem:[%s1500] sm:$0xf]
      %v1502 = vld [vmem:[%s1500 + $0x4] sm:$0xf]
      %v1503 = vld [vmem:[%s1500 + $0x8] sm:$0xf]
      %v1504 = vld [vmem:[%s1500 + $0xc] sm:$0xf]
      %v1505 = vpack.c.bf16 %v1498, %v1498
      %v1506 = vpack.c.bf16 %v1497, %v1497
      %v1507 = vpack.c.bf16 %v1499, %v1499
      %v1512 = vunpack.c.l.b16 %v1501
      %v1513 = vunpack.c.l.b16 %v1502
      %v1514 = vunpack.c.l.b16 %v1503
      %v1515 = vunpack.c.l.b16 %v1504
      %v1516 = vpack.c.b16 %v1513, %v1512
      %v1517 = vpack.c.b16 %v1515, %v1514
      %v1519 = vsel %vm469, %v1516, 0
      %v1522 = vsel %vm469, %v1517, 0
      %v1525 = vsel %vm476, %v1505, 0
      %v1528 = vsel %vm476, %v1506, 0
      %v1531 = vsel %vm476, %v1507, 0
      %1533 = vmatprep.subr.bf16.mxu0 %v1528
      %1534 = vmatpush1.bf16.msra.mxu0 %v1525
      %1535 = vmatprep.subr.bf16.mxu0 0
      %1536 = vmatpush1.bf16.msra.mxu0 0
      %1537 = vmatprep.subr.bf16.mxu0 0
      %1538 = vmatpush1.bf16.msra.mxu0 0
      %1539 = vmatprep.subr.bf16.mxu0 0
      %1540 = vmatpush1.bf16.msra.mxu0 0
      %1541 = vmatprep.subr.bf16.mxu0 0
      %1542 = vmatpush1.bf16.msra.mxu0 0
      %1543 = vmatprep.subr.bf16.mxu0 0
      %1544 = vmatpush1.bf16.msra.mxu0 0
      %1545 = vmatprep.subr.bf16.mxu0 0
      %1546 = vmatpush1.bf16.msra.mxu0 0
      %1547 = vmatprep.subr.bf16.mxu0 0
      %1548 = vmatpush1.bf16.msra.mxu0 0
      %1549 = vmatprep.subr.bf16.mxu0 0
      %1550 = vmatpush1.bf16.msra.mxu0 0
      %1551 = vmatprep.subr.bf16.mxu0 0
      %1552 = vmatpush1.bf16.msra.mxu0 0
      %1553 = vmatprep.subr.bf16.mxu0 0
      %1554 = vmatpush1.bf16.msra.mxu0 0
      %1555 = vmatprep.subr.bf16.mxu0 0
      %1556 = vmatpush1.bf16.msra.mxu0 0
      %1557 = vmatprep.subr.bf16.mxu0 0
      %1558 = vmatpush1.bf16.msra.mxu0 0
      %1559 = vmatprep.subr.bf16.mxu0 0
      %1560 = vmatpush1.bf16.msra.mxu0 0
      %1561 = vmatprep.subr.bf16.mxu0 0
      %1562 = vmatpush1.bf16.msra.mxu0 0
      %1563 = vmatprep.subr.bf16.mxu0 0
      %1564 = vmatpush1.bf16.msra.mxu0 0
      %1565 = vmatprep.mubr.bf16.mxu0 0
      %1566 = vmatmul.mubr.bf16.gmra.mrb[0].mxu0 %v1519
      %v1567 = vpop.f32.mrb[0].mxu0
      %v1568 = vadd.f32 0.0, %v1567
      %v1569 = vpop.f32.mrb[0].mxu0
      %v1570 = vadd.f32 0.0, %v1569
      %v1571 = vpop.f32.mrb[0].mxu0
      %v1572 = vadd.f32 0.0, %v1571
      %v1573 = vpop.f32.mrb[0].mxu0
      %v1574 = vadd.f32 0.0, %v1573
      %1575 = vmatprep.mubr.bf16.mxu0 0
      %1576 = vmatmul.mubr.bf16.gmra.mrb[0].mxu0 %v1522
      %v1577 = vpop.f32.mrb[0].mxu0
      %v1578 = vadd.f32 0.0, %v1577
      %v1579 = vpop.f32.mrb[0].mxu0
      %v1580 = vadd.f32 0.0, %v1579
      %v1581 = vpop.f32.mrb[0].mxu0
      %v1582 = vadd.f32 0.0, %v1581
      %v1583 = vpop.f32.mrb[0].mxu0
      %v1584 = vadd.f32 0.0, %v1583
      %1585 = vdwg.mxu0
      %1586 = vmatprep.subr.bf16.mxu0 0
      %1587 = vmatpush1.bf16.msra.mxu0 %v1531
      %1588 = vmatprep.subr.bf16.mxu0 0
      %1589 = vmatpush1.bf16.msra.mxu0 0
      %1590 = vmatprep.subr.bf16.mxu0 0
      %1591 = vmatpush1.bf16.msra.mxu0 0
      %1592 = vmatprep.subr.bf16.mxu0 0
      %1593 = vmatpush1.bf16.msra.mxu0 0
      %1594 = vmatprep.subr.bf16.mxu0 0
      %1595 = vmatpush1.bf16.msra.mxu0 0
      %1596 = vmatprep.subr.bf16.mxu0 0
      %1597 = vmatpush1.bf16.msra.mxu0 0
      %1598 = vmatprep.subr.bf16.mxu0 0
      %1599 = vmatpush1.bf16.msra.mxu0 0
      %1600 = vmatprep.subr.bf16.mxu0 0
      %1601 = vmatpush1.bf16.msra.mxu0 0
      %1602 = vmatprep.subr.bf16.mxu0 0
      %1603 = vmatpush1.bf16.msra.mxu0 0
      %1604 = vmatprep.subr.bf16.mxu0 0
      %1605 = vmatpush1.bf16.msra.mxu0 0
      %1606 = vmatprep.subr.bf16.mxu0 0
      %1607 = vmatpush1.bf16.msra.mxu0 0
      %1608 = vmatprep.subr.bf16.mxu0 0
      %1609 = vmatpush1.bf16.msra.mxu0 0
      %1610 = vmatprep.subr.bf16.mxu0 0
      %1611 = vmatpush1.bf16.msra.mxu0 0
      %1612 = vmatprep.subr.bf16.mxu0 0
      %1613 = vmatpush1.bf16.msra.mxu0 0
      %1614 = vmatprep.subr.bf16.mxu0 0
      %1615 = vmatpush1.bf16.msra.mxu0 0
      %1616 = vmatprep.subr.bf16.mxu0 0
      %1617 = vmatpush1.bf16.msra.mxu0 0
      %1618 = vmatprep.mubr.bf16.mxu0 0
      %1619 = vmatmul.mubr.bf16.gmra.mrb[0].mxu0 %v1519
      %v1620 = vpop.f32.mrb[0].mxu0
      %v1621 = vadd.f32 0.0, %v1620
      %v1622 = vpop.f32.mrb[0].mxu0
      %v1623 = vpop.f32.mrb[0].mxu0
      %v1624 = vadd.f32 0.0, %v1623
      %v1625 = vpop.f32.mrb[0].mxu0
      %1626 = vmatprep.mubr.bf16.mxu0 0
      %1627 = vmatmul.mubr.bf16.gmra.mrb[0].mxu0 %v1522
      %v1628 = vpop.f32.mrb[0].mxu0
      %v1629 = vadd.f32 0.0, %v1628
      %v1630 = vpop.f32.mrb[0].mxu0
      %v1631 = vpop.f32.mrb[0].mxu0
      %v1632 = vadd.f32 0.0, %v1631
      %v1633 = vpop.f32.mrb[0].mxu0
      %1634 = vdwg.mxu0
      %v1635 = vadd.f32 %v1478, %v1568
      %v1636 = vadd.f32 %v1479, %v1570
      %v1637 = vadd.f32 %v1480, %v1621
      %v1638 = vadd.f32 %v1481, %v1572
      %v1639 = vadd.f32 %v1482, %v1574
      %v1640 = vadd.f32 %v1483, %v1624
      %v1641 = vadd.f32 %v1484, %v1578
      %v1642 = vadd.f32 %v1485, %v1580
      %v1643 = vadd.f32 %v1486, %v1629
      %v1644 = vadd.f32 %v1487, %v1582
      %v1645 = vadd.f32 %v1488, %v1584
      %v1646 = vadd.f32 %v1489, %v1632
      %1647 = vrot.lane.b32.xlu0 %v417, 109
      %v1648 = vpop.permute.xlu0 %1647
      %1649 = vrot.lane.b32.xlu0 %v420, 109
      %v1650 = vpop.permute.xlu0 %1649
      %1651 = vrot.lane.b32.xlu0 %v418, 109
      %v1652 = vpop.permute.xlu0 %1651
      %vm1653 = vcmp.lt.s32.totalorder %v429, 109
      %v1654 = vsel %vm1653, %v1650, %v1652
      %v1655 = vsel %vm1653, %v1648, %v1650
      %v1656 = vsel %vm1653, %v1652, %v1648
      %s1657 = scalar_lea.vmem %s2, 128
      %v1658 = vld [vmem:[%s1657] sm:$0xf]
      %v1659 = vld [vmem:[%s1657 + $0x4] sm:$0xf]
      %v1660 = vld [vmem:[%s1657 + $0x8] sm:$0xf]
      %v1661 = vld [vmem:[%s1657 + $0xc] sm:$0xf]
      %v1662 = vpack.c.bf16 %v1655, %v1655
      %v1663 = vpack.c.bf16 %v1654, %v1654
      %v1664 = vpack.c.bf16 %v1656, %v1656
      %v1669 = vunpack.c.l.b16 %v1658
      %v1670 = vunpack.c.l.b16 %v1659
      %v1671 = vunpack.c.l.b16 %v1660
      %v1672 = vunpack.c.l.b16 %v1661
      %v1673 = vpack.c.b16 %v1670, %v1669
      %v1674 = vpack.c.b16 %v1672, %v1671
      %v1676 = vsel %vm469, %v1673, 0
      %v1679 = vsel %vm469, %v1674, 0
      %v1682 = vsel %vm476, %v1662, 0
      %v1685 = vsel %vm476, %v1663, 0
      %v1688 = vsel %vm476, %v1664, 0
      %1690 = vmatprep.subr.bf16.mxu0 %v1685
      %1691 = vmatpush1.bf16.msra.mxu0 %v1682
      %1692 = vmatprep.subr.bf16.mxu0 0
      %1693 = vmatpush1.bf16.msra.mxu0 0
      %1694 = vmatprep.subr.bf16.mxu0 0
      %1695 = vmatpush1.bf16.msra.mxu0 0
      %1696 = vmatprep.subr.bf16.mxu0 0
      %1697 = vmatpush1.bf16.msra.mxu0 0
      %1698 = vmatprep.subr.bf16.mxu0 0
      %1699 = vmatpush1.bf16.msra.mxu0 0
      %1700 = vmatprep.subr.bf16.mxu0 0
      %1701 = vmatpush1.bf16.msra.mxu0 0
      %1702 = vmatprep.subr.bf16.mxu0 0
      %1703 = vmatpush1.bf16.msra.mxu0 0
      %1704 = vmatprep.subr.bf16.mxu0 0
      %1705 = vmatpush1.bf16.msra.mxu0 0
      %1706 = vmatprep.subr.bf16.mxu0 0
      %1707 = vmatpush1.bf16.msra.mxu0 0
      %1708 = vmatprep.subr.bf16.mxu0 0
      %1709 = vmatpush1.bf16.msra.mxu0 0
      %1710 = vmatprep.subr.bf16.mxu0 0
      %1711 = vmatpush1.bf16.msra.mxu0 0
      %1712 = vmatprep.subr.bf16.mxu0 0
      %1713 = vmatpush1.bf16.msra.mxu0 0
      %1714 = vmatprep.subr.bf16.mxu0 0
      %1715 = vmatpush1.bf16.msra.mxu0 0
      %1716 = vmatprep.subr.bf16.mxu0 0
      %1717 = vmatpush1.bf16.msra.mxu0 0
      %1718 = vmatprep.subr.bf16.mxu0 0
      %1719 = vmatpush1.bf16.msra.mxu0 0
      %1720 = vmatprep.subr.bf16.mxu0 0
      %1721 = vmatpush1.bf16.msra.mxu0 0
      %1722 = vmatprep.mubr.bf16.mxu0 0
      %1723 = vmatmul.mubr.bf16.gmra.mrb[0].mxu0 %v1676
      %v1724 = vpop.f32.mrb[0].mxu0
      %v1725 = vadd.f32 0.0, %v1724
      %v1726 = vpop.f32.mrb[0].mxu0
      %v1727 = vadd.f32 0.0, %v1726
      %v1728 = vpop.f32.mrb[0].mxu0
      %v1729 = vadd.f32 0.0, %v1728
      %v1730 = vpop.f32.mrb[0].mxu0
      %v1731 = vadd.f32 0.0, %v1730
      %1732 = vmatprep.mubr.bf16.mxu0 0
      %1733 = vmatmul.mubr.bf16.gmra.mrb[0].mxu0 %v1679
      %v1734 = vpop.f32.mrb[0].mxu0
      %v1735 = vadd.f32 0.0, %v1734
      %v1736 = vpop.f32.mrb[0].mxu0
      %v1737 = vadd.f32 0.0, %v1736
      %v1738 = vpop.f32.mrb[0].mxu0
      %v1739 = vadd.f32 0.0, %v1738
      %v1740 = vpop.f32.mrb[0].mxu0
      %v1741 = vadd.f32 0.0, %v1740
      %1742 = vdwg.mxu0
      %1743 = vmatprep.subr.bf16.mxu0 0
      %1744 = vmatpush1.bf16.msra.mxu0 %v1688
      %1745 = vmatprep.subr.bf16.mxu0 0
      %1746 = vmatpush1.bf16.msra.mxu0 0
      %1747 = vmatprep.subr.bf16.mxu0 0
      %1748 = vmatpush1.bf16.msra.mxu0 0
      %1749 = vmatprep.subr.bf16.mxu0 0
      %1750 = vmatpush1.bf16.msra.mxu0 0
      %1751 = vmatprep.subr.bf16.mxu0 0
      %1752 = vmatpush1.bf16.msra.mxu0 0
      %1753 = vmatprep.subr.bf16.mxu0 0
      %1754 = vmatpush1.bf16.msra.mxu0 0
      %1755 = vmatprep.subr.bf16.mxu0 0
      %1756 = vmatpush1.bf16.msra.mxu0 0
      %1757 = vmatprep.subr.bf16.mxu0 0
      %1758 = vmatpush1.bf16.msra.mxu0 0
      %1759 = vmatprep.subr.bf16.mxu0 0
      %1760 = vmatpush1.bf16.msra.mxu0 0
      %1761 = vmatprep.subr.bf16.mxu0 0
      %1762 = vmatpush1.bf16.msra.mxu0 0
      %1763 = vmatprep.subr.bf16.mxu0 0
      %1764 = vmatpush1.bf16.msra.mxu0 0
      %1765 = vmatprep.subr.bf16.mxu0 0
      %1766 = vmatpush1.bf16.msra.mxu0 0
      %1767 = vmatprep.subr.bf16.mxu0 0
      %1768 = vmatpush1.bf16.msra.mxu0 0
      %1769 = vmatprep.subr.bf16.mxu0 0
      %1770 = vmatpush1.bf16.msra.mxu0 0
      %1771 = vmatprep.subr.bf16.mxu0 0
      %1772 = vmatpush1.bf16.msra.mxu0 0
      %1773 = vmatprep.subr.bf16.mxu0 0
      %1774 = vmatpush1.bf16.msra.mxu0 0
      %1775 = vmatprep.mubr.bf16.mxu0 0
      %1776 = vmatmul.mubr.bf16.gmra.mrb[0].mxu0 %v1676
      %v1777 = vpop.f32.mrb[0].mxu0
      %v1778 = vadd.f32 0.0, %v1777
      %v1779 = vpop.f32.mrb[0].mxu0
      %v1780 = vpop.f32.mrb[0].mxu0
      %v1781 = vadd.f32 0.0, %v1780
      %v1782 = vpop.f32.mrb[0].mxu0
      %1783 = vmatprep.mubr.bf16.mxu0 0
      %1784 = vmatmul.mubr.bf16.gmra.mrb[0].mxu0 %v1679
      %v1785 = vpop.f32.mrb[0].mxu0
      %v1786 = vadd.f32 0.0, %v1785
      %v1787 = vpop.f32.mrb[0].mxu0
      %v1788 = vpop.f32.mrb[0].mxu0
      %v1789 = vadd.f32 0.0, %v1788
      %v1790 = vpop.f32.mrb[0].mxu0
      %1791 = vdwg.mxu0
      %v1792 = vadd.f32 %v1635, %v1725
      %v1793 = vadd.f32 %v1636, %v1727
      %v1794 = vadd.f32 %v1637, %v1778
      %v1795 = vadd.f32 %v1638, %v1729
      %v1796 = vadd.f32 %v1639, %v1731
      %v1797 = vadd.f32 %v1640, %v1781
      %v1798 = vadd.f32 %v1641, %v1735
      %v1799 = vadd.f32 %v1642, %v1737
      %v1800 = vadd.f32 %v1643, %v1786
      %v1801 = vadd.f32 %v1644, %v1739
      %v1802 = vadd.f32 %v1645, %v1741
      %v1803 = vadd.f32 %v1646, %v1789
      %v1804 = vld [vmem:[%s3] sm:$0xff]
      %v1805 = vld [vmem:[%s3 + $0x8] sm:$0xff]
      %v1806 = vld [vmem:[%s3 + $0x10] sm:$0xff]
      %v1807 = vld [vmem:[%s3 + $0x18] sm:$0xff]
      %1809 = vset.pattern.permute.xlu0 0
      %1810 = vperm.xlu0 %1809, %v1804
      %v1811 = vpop.permute.xlu0 %1810
      %1814 = vset.pattern.permute.xlu0 0
      %1815 = vperm.xlu0 %1814, %v1805
      %v1816 = vpop.permute.xlu0 %1815
      %1819 = vset.pattern.permute.xlu0 0
      %1820 = vperm.xlu0 %1819, %v1806
      %v1821 = vpop.permute.xlu0 %1820
      %1824 = vset.pattern.permute.xlu0 0
      %1825 = vperm.xlu0 %1824, %v1807
      %v1826 = vpop.permute.xlu0 %1825
      %v1828 = vadd.f32 %v1792, %v1811
      %v1829 = vadd.f32 %v1793, %v1811
      %v1830 = vadd.f32 %v1794, %v1811
      %v1831 = vadd.f32 %v1795, %v1816
      %v1832 = vadd.f32 %v1796, %v1816
      %v1833 = vadd.f32 %v1797, %v1816
      %v1834 = vadd.f32 %v1798, %v1821
      %v1835 = vadd.f32 %v1799, %v1821
      %v1836 = vadd.f32 %v1800, %v1821
      %v1837 = vadd.f32 %v1801, %v1826
      %v1838 = vadd.f32 %v1802, %v1826
      %v1839 = vadd.f32 %v1803, %v1826
      %v1840 = vmax.f32 %v1828, 0.0
      %v1841 = vmax.f32 %v1829, 0.0
      %v1842 = vmax.f32 %v1830, 0.0
      %v1843 = vmax.f32 %v1831, 0.0
      %v1844 = vmax.f32 %v1832, 0.0
      %v1845 = vmax.f32 %v1833, 0.0
      %v1846 = vmax.f32 %v1834, 0.0
      %v1847 = vmax.f32 %v1835, 0.0
      %v1848 = vmax.f32 %v1836, 0.0
      %v1849 = vmax.f32 %v1837, 0.0
      %v1850 = vmax.f32 %v1838, 0.0
      %v1851 = vmax.f32 %v1839, 0.0
      %v1852 = vld [vmem:[%s4] sm:$0x3]
      %v1853 = vpack.c.bf16 %v1843, %v1840
      %v1854 = vpack.c.bf16 %v1844, %v1841
      %v1855 = vpack.c.bf16 %v1845, %v1842
      %v1856 = vpack.c.bf16 %v1849, %v1846
      %v1857 = vpack.c.bf16 %v1850, %v1847
      %v1858 = vpack.c.bf16 %v1851, %v1848
      %v1859 = vld [vmem:[%s5] sm:$0xf]
      %1861 = vset.pattern.permute.xlu0 0
      %1862 = vperm.xlu0 %1861, %v1859
      %v1863 = vpop.permute.xlu0 %1862
      %vm1865 = vcmask 261120
      %v1867 = vsel %vm1865, %v1852, 0
      %1869 = vmatprep.subr.bf16.mxu0 %v1854
      %1870 = vmatpush1.bf16.msra.mxu0 %v1853
      %1871 = vmatprep.subr.bf16.mxu0 %v1857
      %1872 = vmatpush1.bf16.msra.mxu0 %v1856
      %1873 = vmatprep.subr.bf16.mxu0 0
      %1874 = vmatpush1.bf16.msra.mxu0 0
      %1875 = vmatprep.subr.bf16.mxu0 0
      %1876 = vmatpush1.bf16.msra.mxu0 0
      %1877 = vmatprep.subr.bf16.mxu0 0
      %1878 = vmatpush1.bf16.msra.mxu0 0
      %1879 = vmatprep.subr.bf16.mxu0 0
      %1880 = vmatpush1.bf16.msra.mxu0 0
      %1881 = vmatprep.subr.bf16.mxu0 0
      %1882 = vmatpush1.bf16.msra.mxu0 0
      %1883 = vmatprep.subr.bf16.mxu0 0
      %1884 = vmatpush1.bf16.msra.mxu0 0
      %1885 = vmatprep.subr.bf16.mxu0 0
      %1886 = vmatpush1.bf16.msra.mxu0 0
      %1887 = vmatprep.subr.bf16.mxu0 0
      %1888 = vmatpush1.bf16.msra.mxu0 0
      %1889 = vmatprep.subr.bf16.mxu0 0
      %1890 = vmatpush1.bf16.msra.mxu0 0
      %1891 = vmatprep.subr.bf16.mxu0 0
      %1892 = vmatpush1.bf16.msra.mxu0 0
      %1893 = vmatprep.subr.bf16.mxu0 0
      %1894 = vmatpush1.bf16.msra.mxu0 0
      %1895 = vmatprep.subr.bf16.mxu0 0
      %1896 = vmatpush1.bf16.msra.mxu0 0
      %1897 = vmatprep.subr.bf16.mxu0 0
      %1898 = vmatpush1.bf16.msra.mxu0 0
      %1899 = vmatprep.subr.bf16.mxu0 0
      %1900 = vmatpush1.bf16.msra.mxu0 0
      %1901 = vmatprep.mubr.bf16.mxu0 0
      %1902 = vmatmul.mubr.bf16.gmra.mrb[0].mxu0 %v1867
      %v1903 = vpop.f32.mrb[0].mxu0
      %v1904 = vadd.f32 %v1863, %v1903
      %v1905 = vpop.f32.mrb[0].mxu0
      %v1906 = vadd.f32 %v1863, %v1905
      %v1907 = vpop.f32.mrb[0].mxu0
      %v1908 = vpop.f32.mrb[0].mxu0
      %1909 = vdwg.mxu0
      %1910 = vmatprep.subr.bf16.mxu0 0
      %1911 = vmatpush1.bf16.msra.mxu0 %v1855
      %1912 = vmatprep.subr.bf16.mxu0 0
      %1913 = vmatpush1.bf16.msra.mxu0 %v1858
      %1914 = vmatprep.subr.bf16.mxu0 0
      %1915 = vmatpush1.bf16.msra.mxu0 0
      %1916 = vmatprep.subr.bf16.mxu0 0
      %1917 = vmatpush1.bf16.msra.mxu0 0
      %1918 = vmatprep.subr.bf16.mxu0 0
      %1919 = vmatpush1.bf16.msra.mxu0 0
      %1920 = vmatprep.subr.bf16.mxu0 0
      %1921 = vmatpush1.bf16.msra.mxu0 0
      %1922 = vmatprep.subr.bf16.mxu0 0
      %1923 = vmatpush1.bf16.msra.mxu0 0
      %1924 = vmatprep.subr.bf16.mxu0 0
      %1925 = vmatpush1.bf16.msra.mxu0 0
      %1926 = vmatprep.subr.bf16.mxu0 0
      %1927 = vmatpush1.bf16.msra.mxu0 0
      %1928 = vmatprep.subr.bf16.mxu0 0
      %1929 = vmatpush1.bf16.msra.mxu0 0
      %1930 = vmatprep.subr.bf16.mxu0 0
      %1931 = vmatpush1.bf16.msra.mxu0 0
      %1932 = vmatprep.subr.bf16.mxu0 0
      %1933 = vmatpush1.bf16.msra.mxu0 0
      %1934 = vmatprep.subr.bf16.mxu0 0
      %1935 = vmatpush1.bf16.msra.mxu0 0
      %1936 = vmatprep.subr.bf16.mxu0 0
      %1937 = vmatpush1.bf16.msra.mxu0 0
      %1938 = vmatprep.subr.bf16.mxu0 0
      %1939 = vmatpush1.bf16.msra.mxu0 0
      %1940 = vmatprep.subr.bf16.mxu0 0
      %1941 = vmatpush1.bf16.msra.mxu0 0
      %1942 = vmatprep.mubr.bf16.mxu0 0
      %1943 = vmatmul.mubr.bf16.gmra.mrb[0].mxu0 %v1867
      %v1944 = vpop.f32.mrb[0].mxu0
      %v1945 = vadd.f32 %v1863, %v1944
      %v1946 = vpop.f32.mrb[0].mxu0
      %v1947 = vpop.f32.mrb[0].mxu0
      %v1948 = vpop.f32.mrb[0].mxu0
      %1949 = vdwg.mxu0
      %v1952 = vcombine.low %v1904, %v1906
      %1954 = vst [vmem:[%s400] sm:$0xff] %v1952
      %1955 = vst [vmem:[%s400 + $0x8] sm:$0xf] %v1945
      %v1956 = vld [vmem:[%s395] sm:$0x7]
      %vm1957 = vcmp.ge.s32.totalorder %v1956, 0
      %v1958 = vsel %vm1957, 1, 0
      %v1959 = vcvt.s32.f32 %v1958
      %v1960 = vlaneseq
      %v1961 = vshrl.u32 %v1960, 7
      %v1962 = vlaneseq
      %v1963 = vshrl.u32 %v1962, 7
      %v1964 = vsub.s32 0, %v1963
      %v1965 = vrot.slane %v1956, %v1964
      %v1966 = vlaneseq
      %v1967 = vshrl.u32 %v1966, 7
      %v1968 = vsub.s32 1, %v1967
      %v1969 = vrot.slane %v1956, %v1968
      %v1970 = vlaneseq
      %v1971 = vshrl.u32 %v1970, 7
      %v1972 = vsub.s32 2, %v1971
      %v1973 = vrot.slane %v1956, %v1972
      %vm1974 = vcmp.eq.s32.totalorder %v1965, %v1961
      %vm1975 = vcmp.eq.s32.totalorder %v1969, %v1961
      %vm1976 = vcmp.eq.s32.totalorder %v1973, %v1961
      %v1977 = vsel %vm1974, 1, 0
      %v1978 = vsel %vm1975, 1, 0
      %v1979 = vsel %vm1976, 1, 0
      %v1980 = vcvt.s32.f32 %v1977
      %v1981 = vcvt.s32.f32 %v1978
      %v1982 = vcvt.s32.f32 %v1979
      %vm1983 = vcmask 1043456
      %v1984 = vsel %vm1983, %v1904, -inf
      %v1985 = vrot.slane %v1984, 4
      %v1986 = vmax.f32 %v1984, %v1985
      %v1987 = vrot.slane %v1986, 2
      %v1988 = vmax.f32 %v1986, %v1987
      %v1989 = vrot.slane %v1988, 1
      %v1990 = vmax.f32 %v1988, %v1989
      %v1991 = vsel %vm1983, %v1906, -inf
      %v1992 = vrot.slane %v1991, 4
      %v1993 = vmax.f32 %v1991, %v1992
      %v1994 = vrot.slane %v1993, 2
      %v1995 = vmax.f32 %v1993, %v1994
      %v1996 = vrot.slane %v1995, 1
      %v1997 = vmax.f32 %v1995, %v1996
      %v1998 = vsel %vm1983, %v1945, -inf
      %v1999 = vrot.slane %v1998, 4
      %v2000 = vmax.f32 %v1998, %v1999
      %v2001 = vrot.slane %v2000, 2
      %v2002 = vmax.f32 %v2000, %v2001
      %v2003 = vrot.slane %v2002, 1
      %v2004 = vmax.f32 %v2002, %v2003
      %v2005 = vsub.f32 %v1904, %v1990
      %v2006 = vsub.f32 %v1906, %v1997
      %v2007 = vsub.f32 %v1945, %v2004
      %v2008 = vmul.f32 %v2005, 1.442695
      %v2009 = vpow.pop %v2008
      %v2010 = vmul.f32 %v2006, 1.442695
      %v2011 = vpow.pop %v2010
      %v2012 = vmul.f32 %v2007, 1.442695
      %v2013 = vpow.pop %v2012
      %v2014 = vsel %vm1983, %v2009, 0.0
      %v2015 = vrot.slane %v2014, 4
      %v2016 = vadd.f32 %v2014, %v2015
      %v2017 = vrot.slane %v2016, 2
      %v2018 = vadd.f32 %v2016, %v2017
      %v2019 = vrot.slane %v2018, 1
      %v2020 = vadd.f32 %v2018, %v2019
      %v2021 = vsel %vm1983, %v2011, 0.0
      %v2022 = vrot.slane %v2021, 4
      %v2023 = vadd.f32 %v2021, %v2022
      %v2024 = vrot.slane %v2023, 2
      %v2025 = vadd.f32 %v2023, %v2024
      %v2026 = vrot.slane %v2025, 1
      %v2027 = vadd.f32 %v2025, %v2026
      %v2028 = vsel %vm1983, %v2013, 0.0
      %v2029 = vrot.slane %v2028, 4
      %v2030 = vadd.f32 %v2028, %v2029
      %v2031 = vrot.slane %v2030, 2
      %v2032 = vadd.f32 %v2030, %v2031
      %v2033 = vrot.slane %v2032, 1
      %v2034 = vadd.f32 %v2032, %v2033
      %v2035 = vlog2.pop %v2020
      %v2036 = vmul.f32 %v2035, 0.6931472
      %v2037 = vlog2.pop %v2027
      %v2038 = vmul.f32 %v2037, 0.6931472
      %v2039 = vlog2.pop %v2034
      %v2040 = vmul.f32 %v2039, 0.6931472
      %v2041 = vsub.f32 %v2005, %v2036
      %v2042 = vsub.f32 %v2006, %v2038
      %v2043 = vsub.f32 %v2007, %v2040
      %v2044 = vrcp.pop %v2020
      %v2045 = vrcp.pop %v2027
      %v2046 = vrcp.pop %v2034
      %v2047 = vmul.f32 %v2009, %v2044
      %v2048 = vmul.f32 %v2011, %v2045
      %v2049 = vmul.f32 %v2013, %v2046
      %v2050 = vsub.f32 0.0, %v1980
      %v2051 = vsub.f32 0.0, %v1981
      %v2052 = vsub.f32 0.0, %v1982
      %v2053 = vmul.f32 %v2050, %v2041
      %v2054 = vmul.f32 %v2051, %v2042
      %v2055 = vmul.f32 %v2052, %v2043
      %v2056 = vsel %vm1983, %v2053, 0.0
      %v2057 = vsel %vm1983, %v2054, 0.0
      %v2058 = vadd.f32 %v2056, %v2057
      %v2059 = vsel %vm1983, %v2055, 0.0
      %v2060 = vadd.f32 %v2058, %v2059
      %2061 = vadd.xlane.f32.xlu0 %v2060
      %v2062 = vpop.xlane.xlu0 %2061
      %v2063 = vsel %vm1983, %v2062, 0.0
      %v2064 = vrot.slane %v2063, 4
      %v2065 = vadd.f32 %v2063, %v2064
      %v2066 = vrot.slane %v2065, 2
      %v2067 = vadd.f32 %v2065, %v2066
      %v2068 = vrot.slane %v2067, 1
      %v2069 = vadd.f32 %v2067, %v2068
      %vm2070 = vcmask 0
      %2071 = vst.msk [vmem:[%s403] sm:$0x1] %vm2070, %v2069
      %v2072 = vmul.f32 %v2047, %v1980
      %v2073 = vmul.f32 %v2048, %v1981
      %v2074 = vmul.f32 %v2049, %v1982
      %v2075 = vsel %vm1983, %v2072, 0.0
      %v2076 = vsel %vm1983, %v2073, 0.0
      %v2077 = vadd.f32 %v2075, %v2076
      %v2078 = vsel %vm1983, %v2074, 0.0
      %v2079 = vadd.f32 %v2077, %v2078
      %2080 = vadd.xlane.f32.xlu0 %v2079
      %v2081 = vpop.xlane.xlu0 %2080
      %vm2082 = vcmask 3072
      %2083 = vst.msk [vmem:[%s407] sm:$0xf] %vm2082, %v2081
      %v2085 = vlaneseq
      %v2086 = vshrl.u32 %v2085, 7
      %v2087 = vsub.s32 0, %v2086
      %v2088 = vrot.slane %v1959, %v2087
      %v2089 = vlaneseq
      %v2090 = vshrl.u32 %v2089, 7
      %v2091 = vsub.s32 1, %v2090
      %v2092 = vrot.slane %v1959, %v2091
      %v2093 = vlaneseq
      %v2094 = vshrl.u32 %v2093, 7
      %v2095 = vsub.s32 2, %v2094
      %v2096 = vrot.slane %v1959, %v2095
      %v2100 = vmul.f32 %v2047, %v2088
      %v2101 = vmul.f32 %v2048, %v2092
      %v2102 = vmul.f32 %v2049, %v2096
      %v2103 = vsel %vm1983, %v2100, 0.0
      %v2104 = vsel %vm1983, %v2101, 0.0
      %v2105 = vadd.f32 %v2103, %v2104
      %v2106 = vsel %vm1983, %v2102, 0.0
      %v2107 = vadd.f32 %v2105, %v2106
      %2108 = vadd.xlane.f32.xlu0 %v2107
      %v2109 = vpop.xlane.xlu0 %2108
      %2110 = vst.msk [vmem:[%s411] sm:$0xf] %vm2082, %v2109
      %v2111 = vsel %vm1983, %v1980, 0.0
      %v2112 = vsel %vm1983, %v1981, 0.0
      %v2113 = vadd.f32 %v2111, %v2112
      %v2114 = vsel %vm1983, %v1982, 0.0
      %v2115 = vadd.f32 %v2113, %v2114
      %2116 = vadd.xlane.f32.xlu0 %v2115
      %v2117 = vpop.xlane.xlu0 %2116
      %2118 = vst.msk [vmem:[%s415] sm:$0xf] %vm2082, %v2117
      %p2119 = scmp.lt.s32.totalorder %s22, 1
      %s2120 = scalar_select %p2119, %s22, 1
      %s2121 = smul.addr %s2120, 3
      %s2122 = smul.addr %s2121, 4
      %s2123 = scalar_lea.vmem %s6, %s2122
      %p2124 = scmp.lt.s32.totalorder %s22, 1
      %s2125 = scalar_select %p2124, %s22, 1
      %s2126 = scalar_lea.vmem %s7, %s2125
      %p2127 = scmp.lt.s32.totalorder %s22, 1
      %s2128 = scalar_select %p2127, %s22, 1
      %s2129 = smul.addr %s2128, 4
      %s2130 = scalar_lea.vmem %s8, %s2129
      %p2131 = scmp.lt.s32.totalorder %s22, 1
      %s2132 = scalar_select %p2131, %s22, 1
      %s2133 = smul.addr %s2132, 4
      %s2134 = scalar_lea.vmem %s9, %s2133
      %p2135 = scmp.lt.s32.totalorder %s22, 1
      %s2136 = scalar_select %p2135, %s22, 1
      %s2137 = smul.addr %s2136, 4
      %s2138 = scalar_lea.vmem %s10, %s2137
      // Predicated region
      $region45: #{network_wrapper_forward.1} parent=43 // pred_check
        %p2139 = pneg %p176
      $region46: #{network_wrapper_forward.1} parent=43 // pred_check_branch
        %2141 = sbr.rel (%p2139) target = $region48
      $region47: #{network_wrapper_forward.1} parent=43 // pred_region
        _
      $region48: #{network_wrapper_forward.1} parent=43 // pred_fallthru
        _
      // Predicated region
      $region49: #{network_wrapper_forward.1} parent=43 // pred_check
        %p2142 = pneg %p202
      $region50: #{network_wrapper_forward.1} parent=43 // pred_check_branch
        %2144 = sbr.rel (%p2142) target = $region52
      $region51: #{network_wrapper_forward.1} parent=43 // pred_region
        _
      $region52: #{network_wrapper_forward.1} parent=43 // pred_fallthru
        _
      // Predicated region
      $region53: #{network_wrapper_forward.1} parent=43 // pred_check
        %p2145 = pneg %p228
      $region54: #{network_wrapper_forward.1} parent=43 // pred_check_branch
        %2147 = sbr.rel (%p2145) target = $region56
      $region55: #{network_wrapper_forward.1} parent=43 // pred_region
        _
      $region56: #{network_wrapper_forward.1} parent=43 // pred_fallthru
        _
      // Predicated region
      $region57: #{network_wrapper_forward.1} parent=43 // pred_check
        %p2148 = pneg %p254
      $region58: #{network_wrapper_forward.1} parent=43 // pred_check_branch
        %2150 = sbr.rel (%p2148) target = $region60
      $region59: #{network_wrapper_forward.1} parent=43 // pred_region
        _
      $region60: #{network_wrapper_forward.1} parent=43 // pred_fallthru
        _
      // Predicated region
      $region61: #{network_wrapper_forward.1} parent=43 // pred_check
        %p2151 = pneg %p280
      $region62: #{network_wrapper_forward.1} parent=43 // pred_check_branch
        %2153 = sbr.rel (%p2151) target = $region64
      $region63: #{network_wrapper_forward.1} parent=43 // pred_region
        _
      $region64: #{network_wrapper_forward.1} parent=43 // pred_fallthru
        _
    $region44: #{network_wrapper_forward.1} parent=5 // pred_fallthru
      _
    %p2154 = scmp.le.s32.totalorder 2, %s17
    // Predicated region
    $region65: #{network_wrapper_forward.1} parent=5 // pred_check
      %p2155 = pneg %p2154
    $region66: #{network_wrapper_forward.1} parent=5 // pred_check_branch
      %2157 = sbr.rel (%p2155) target = $region68
    $region67: #{network_wrapper_forward.1} parent=5 // pred_region
      %s2158 = ssub.s32 %s17, 2
      // Predicated region
      $region69: #{network_wrapper_forward.1} parent=67 // pred_check
        %p2159 = pneg %p182
      $region70: #{network_wrapper_forward.1} parent=67 // pred_check_branch
        %2161 = sbr.rel (%p2159) target = $region72
      $region71: #{network_wrapper_forward.1} parent=67 // pred_region
        %p2162 = scmp.lt.s32.totalorder %s23, 1
        %s2163 = scalar_select %p2162, %s23, 1
        %s2164 = smul.addr %s2163, 3
        %s2165 = smul.addr %s2164, 4
        %s2166 = scalar_lea.vmem %s6, %s2165
      $region72: #{network_wrapper_forward.1} parent=67 // pred_fallthru
        _
      // Predicated region
      $region73: #{network_wrapper_forward.1} parent=67 // pred_check
        %p2167 = pneg %p208
      $region74: #{network_wrapper_forward.1} parent=67 // pred_check_branch
        %2169 = sbr.rel (%p2167) target = $region76
      $region75: #{network_wrapper_forward.1} parent=67 // pred_region
        %p2170 = scmp.lt.s32.totalorder %s23, 1
        %s2171 = scalar_select %p2170, %s23, 1
        %s2172 = scalar_lea.vmem %s7, %s2171
      $region76: #{network_wrapper_forward.1} parent=67 // pred_fallthru
        _
      // Predicated region
      $region77: #{network_wrapper_forward.1} parent=67 // pred_check
        %p2173 = pneg %p234
      $region78: #{network_wrapper_forward.1} parent=67 // pred_check_branch
        %2175 = sbr.rel (%p2173) target = $region80
      $region79: #{network_wrapper_forward.1} parent=67 // pred_region
        %p2176 = scmp.lt.s32.totalorder %s23, 1
        %s2177 = scalar_select %p2176, %s23, 1
        %s2178 = smul.addr %s2177, 4
        %s2179 = scalar_lea.vmem %s8, %s2178
      $region80: #{network_wrapper_forward.1} parent=67 // pred_fallthru
        _
      // Predicated region
      $region81: #{network_wrapper_forward.1} parent=67 // pred_check
        %p2180 = pneg %p260
      $region82: #{network_wrapper_forward.1} parent=67 // pred_check_branch
        %2182 = sbr.rel (%p2180) target = $region84
      $region83: #{network_wrapper_forward.1} parent=67 // pred_region
        %p2183 = scmp.lt.s32.totalorder %s23, 1
        %s2184 = scalar_select %p2183, %s23, 1
        %s2185 = smul.addr %s2184, 4
        %s2186 = scalar_lea.vmem %s9, %s2185
      $region84: #{network_wrapper_forward.1} parent=67 // pred_fallthru
        _
      // Predicated region
      $region85: #{network_wrapper_forward.1} parent=67 // pred_check
        %p2187 = pneg %p286
      $region86: #{network_wrapper_forward.1} parent=67 // pred_check_branch
        %2189 = sbr.rel (%p2187) target = $region88
      $region87: #{network_wrapper_forward.1} parent=67 // pred_region
        %p2190 = scmp.lt.s32.totalorder %s23, 1
        %s2191 = scalar_select %p2190, %s23, 1
        %s2192 = smul.addr %s2191, 4
        %s2193 = scalar_lea.vmem %s10, %s2192
      $region88: #{network_wrapper_forward.1} parent=67 // pred_fallthru
        _
    $region68: #{network_wrapper_forward.1} parent=5 // pred_fallthru
      _
  $region6: #{network_wrapper_forward.1} parent=0 // loop_footer
    %s21 = sadd.s32 1, %s17
  $region7: #{network_wrapper_forward.1} parent=0 // loop_footer_branch
    %16 = sbr.rel target = $region3
  $region8: #{network_wrapper_forward.1} parent=0 // loop_exit
    _

</llo_original>
